<compile_context>
chip_gen: v5e
topology: v5e:2x2
jax: 0.10.0
libtpu: 0.0.40
codegen_flags: <defaults>
</compile_context>

<pallas_src>
import functools

import jax
import jax.numpy as jnp
from jax import lax
from jax.experimental import pallas as pl
from jax.experimental.pallas import tpu as pltpu


def bert_embedding_kernel(ids_ref,      # SMEM [B, Lp] int32   (scalar prefetch)
                          time_ref,     # VMEM (Tl, 1)  f32
                          table_hbm,    # HBM  [Vp, Dp] f32    (memory_space=ANY)
                          pe_bias_ref,  # VMEM (Tl, Dp) f32    (pe + time-bias folded)
                          freq_ref,     # VMEM (K, Dp)  f32
                          wsin_ref,     # VMEM (K, Dp)  f32
                          wcos_ref,     # VMEM (K, Dp)  f32
                          out_ref,      # VMEM (Tl, Dp) f32
                          gbuf,         # VMEM scratch (2*Tl, Dp) f32 : double-buffered gather
                          gsem,         # DMA semaphores (2,)
                          *, row_chunk):
    j = pl.program_id(0)            # row-tile index (outer, "parallel")
    b = pl.program_id(1)            # batch index    (inner, "arbitrary", in-order)
    nb = pl.num_programs(1)
    rows = out_ref.shape[0]         # Tl (static)
    k_terms = freq_ref.shape[0]     # K  (static)
    base = j * rows
    slot = b % 2

    # ---- token-row gather: HBM table -> VMEM slot, one small DMA per row ------
    def issue_gather(batch, dst_slot):
        dst0 = dst_slot * rows

        @pl.loop(0, rows)
        def _issue(r):
            tok = ids_ref[batch, base + r]
            pltpu.make_async_copy(table_hbm.at[pl.ds(tok, 1), :],
                                  gbuf.at[pl.ds(dst0 + r, 1), :],
                                  gsem.at[dst_slot]).start()

    # Prime the pipeline at the first batch of this row tile (works per-core even
    # when the parallel j axis is megacore-split, since b always restarts at 0).
    @pl.when(b == 0)
    def _():
        issue_gather(0, 0)

    # Cross-step prefetch: issue the NEXT batch's gather (its ids are already in
    # SMEM) so it overlaps this step's compute and the pipelined output writeback.
    @pl.when(b + 1 < nb)
    def _():
        issue_gather(b + 1, 1 - slot)

    # Single aggregate wait for the current slot: the slot's Tl row-DMAs signal a
    # total of Tl*Dp*4 bytes, which is exactly the byte count of this descriptor.
    cur0 = slot * rows
    cur_view = gbuf.at[pl.ds(cur0, rows), :]
    pltpu.make_async_copy(cur_view, cur_view, gsem.at[slot]).wait()

    # ---- Mercer time embedding, strip-mined over row chunks and fused with the
    # ---- gathered token rows + lane-dense store (keeps live vregs bounded) -----
    n_chunks = rows // row_chunk
    for c in range(n_chunks):                      # static offsets -> free slices
        r0 = c * row_chunk
        t = time_ref[pl.ds(r0, row_chunk), :]      # (rc, 1)
        acc = pe_bias_ref[pl.ds(r0, row_chunk), :]  # (rc, Dp): pe + bias
        for k in range(k_terms):                   # K is small; static unroll
            phase = t * freq_ref[pl.ds(k, 1), :]
            acc = acc + jnp.sin(phase) * wsin_ref[pl.ds(k, 1), :] \
                      + jnp.cos(phase) * wcos_ref[pl.ds(k, 1), :]
        g0 = pl.multiple_of(cur0 + r0, row_chunk)
        out_ref[pl.ds(r0, row_chunk), :] = (
            acc + gbuf[pl.ds(g0, row_chunk), :]).astype(out_ref.dtype)


def _round_up(x, m):
    return (x + m - 1) // m * m


def bert_embedding(token_seq, time_seq, params, *, row_tile=512):
    """Eval-mode forward of BERTEmbedding: token + positional + time embeddings."""
    table = params["table"]          # [V, D]
    pe = params["pe"]                # [max_len, D]
    freq = params["freq"]            # [D, K]
    basis = params["basis"]          # [D, 2K]
    bias = params["bias"]            # [D]

    B, L = token_seq.shape
    V, D = table.shape
    K = freq.shape[1]
    assert L <= pe.shape[0], "sequence length exceeds positional-encoding table"

    Dp = _round_up(D, 128)           # lane-dense feature dim
    Lp = _round_up(L, 8)
    if Lp > row_tile:
        Lp = _round_up(Lp, row_tile)
    Tl = min(Lp, row_tile)
    Vp = _round_up(V, 8)

    # Row sub-chunk for the in-kernel strip-mining: ~8 vregs per (rc, Dp) temp,
    # and rc must divide Tl (both are multiples of 8, so rc=8 always works).
    rc = max(8, min(Tl, (8192 // Dp) // 8 * 8))
    while Tl % rc:
        rc -= 8

    def pad2(a, r, c):
        return jnp.pad(a, ((0, r - a.shape[0]), (0, c - a.shape[1])))

    # Host-side (XLA) prep: clamp ids (defined behavior for out-of-range tokens),
    # pad to TPU-friendly shapes, fold pe + bias into one additive constant.
    # Note: ids live in SMEM as [B, Lp]; for very large B*L consider per-batch
    # prefetch to stay inside the SMEM budget.
    ids = jnp.clip(token_seq.astype(jnp.int32), 0, V - 1)
    ids = jnp.pad(ids, ((0, 0), (0, Lp - L)))                              # [B, Lp]
    t3 = jnp.pad(time_seq.astype(jnp.float32), ((0, 0), (0, Lp - L)))
    t3 = t3.reshape(B, Lp, 1)                                              # [B, Lp, 1]
    table_p = pad2(table.astype(jnp.float32), Vp, Dp)                      # stays in HBM
    pe_bias = pad2(pe[:L].astype(jnp.float32) + bias[None, :], Lp, Dp)     # [Lp, Dp]
    freq_r = pad2(freq.T.astype(jnp.float32), K, Dp)                       # [K, Dp]
    wsin_r = pad2(basis[:, :K].T.astype(jnp.float32), K, Dp)               # [K, Dp]
    wcos_r = pad2(basis[:, K:].T.astype(jnp.float32), K, Dp)               # [K, Dp]

    num_j = Lp // Tl
    kernel = functools.partial(bert_embedding_kernel, row_chunk=rc)

    out = pl.pallas_call(
        kernel,
        out_shape=jax.ShapeDtypeStruct((B, Lp, Dp), jnp.float32),
        grid_spec=pltpu.PrefetchScalarGridSpec(
            num_scalar_prefetch=1,                                 # token ids -> SMEM
            grid=(num_j, B),         # row tiles outer, batch inner: pe_bias reused over b
            in_specs=[
                pl.BlockSpec((None, Tl, 1), lambda j, b, _ids: (b, j, 0)),   # time values
                pl.BlockSpec(memory_space=pl.ANY),                           # table (HBM gather)
                pl.BlockSpec((Tl, Dp), lambda j, b, _ids: (j, 0)),           # pe + bias (b-invariant)
                pl.BlockSpec((K, Dp), lambda j, b, _ids: (0, 0)),            # frequencies
                pl.BlockSpec((K, Dp), lambda j, b, _ids: (0, 0)),            # sin weights
                pl.BlockSpec((K, Dp), lambda j, b, _ids: (0, 0)),            # cos weights
            ],
            out_specs=pl.BlockSpec((None, Tl, Dp), lambda j, b, _ids: (b, j, 0)),
            scratch_shapes=[
                pltpu.VMEM((2 * Tl, Dp), jnp.float32),   # double-buffered gathered rows
                pltpu.SemaphoreType.DMA((2,)),           # one DMA semaphore per slot
            ],
        ),
        compiler_params=pltpu.CompilerParams(
            dimension_semantics=("parallel", "arbitrary")),
    )(ids, t3, table_p, pe_bias, freq_r, wsin_r, wcos_r)

    return out[:, :L, :D]


def make_params(key, vocab_size, embed_size, expand_dim, max_len):
    V, D, K = vocab_size, embed_size, expand_dim
    k1, k2, k3 = jax.random.split(key, 3)

    # TokenEmbedding: nn.Embedding(vocab_size, embed_size, padding_idx=0)
    table = 0.02 * jax.random.normal(k1, (V, D), dtype=jnp.float32)
    table = table.at[0].set(0.0)

    # PositionalEmbedding: fixed sinusoidal buffer
    pos = jnp.arange(max_len, dtype=jnp.float32)[:, None]
    div = jnp.exp(jnp.arange(0, D, 2, dtype=jnp.float32) * (-jnp.log(10000.0) / D))
    pe = jnp.zeros((max_len, D), dtype=jnp.float32)
    pe = pe.at[:, 0::2].set(jnp.sin(pos * div))
    pe = pe.at[:, 1::2].set(jnp.cos(pos * div))

    # TimeEmbedding (Mercer basis): freq[d,k] = (k+1) / 10**linspace(0,8,D)[d]
    period = 10.0 ** jnp.linspace(0.0, 8.0, D)
    coef = jnp.arange(1, K + 1, dtype=jnp.float32)
    freq = (1.0 / period)[:, None] * coef[None, :]                          # [D, K]
    basis = 0.02 * jax.random.normal(k2, (D, 2 * K), dtype=jnp.float32)     # learnable
    bias = 0.02 * jax.random.normal(k3, (D,), dtype=jnp.float32)            # learnable

    return {"table": table, "pe": pe, "freq": freq, "basis": basis, "bias": bias}


def reference(token_seq, time_seq, params):
    # Pure-JAX reference of the same forward (eval mode).
    tok = params["table"][token_seq]                                        # [B, L, D]
    pe = params["pe"][None, : token_seq.shape[1]]                           # [1, L, D]
    freq = params["freq"]                                                   # [D, K]
    basis = params["basis"]                                                 # [D, 2K]
    K = freq.shape[1]
    phase = time_seq[..., None, None] * freq[None, None]                    # [B, L, D, K]
    enc = jnp.concatenate([jnp.sin(phase), jnp.cos(phase)], axis=-1)        # [B, L, D, 2K]
    time_emb = (enc * basis[None, None]).sum(-1) + params["bias"]           # [B, L, D]
    return tok + pe + time_emb


if __name__ == "__main__":
    vocab_size, embed_size, expand_dim = 64, 128, 4
    key = jax.random.PRNGKey(0)
    kp, kt, ks = jax.random.split(key, 3)
    params = make_params(kp, vocab_size, embed_size, expand_dim, max_len=16)

    # Case 1: single row tile, two batches (exercises the cross-batch prefetch).
    B, L = 2, 8
    token_seq = jax.random.randint(kt, (B, L), 0, vocab_size, dtype=jnp.int32)
    time_seq = jax.random.uniform(ks, (B, L), dtype=jnp.float32) * 100.0
    out = jax.block_until_ready(bert_embedding(token_seq, time_seq, params))
    ref = reference(token_seq, time_seq, params)
    assert out.shape == (B, L, embed_size)
    assert jnp.allclose(out, ref, rtol=1e-5, atol=1e-5), "case 1 mismatch vs. reference"

    # Case 2: two row tiles, odd batch count (exercises slot wrap at tile boundaries).
    B2, L2 = 3, 16
    tok2 = jax.random.randint(jax.random.PRNGKey(1), (B2, L2), 0, vocab_size, dtype=jnp.int32)
    tim2 = jax.random.uniform(jax.random.PRNGKey(2), (B2, L2), dtype=jnp.float32) * 100.0
    out2 = jax.block_until_ready(bert_embedding(tok2, tim2, params, row_tile=8))
    ref2 = reference(tok2, tim2, params)
    assert out2.shape == (B2, L2, embed_size)
    assert jnp.allclose(out2, ref2, rtol=1e-5, atol=1e-5), "case 2 mismatch vs. reference"

    print("KERNEL_OK")
</pallas_src>

<mosaic_0001>
module attributes {stable_mosaic.version = 11 : i64} {
  func.func @bert_embedding_kernel(%arg0: i32, %arg1: i32, %arg2: memref<2x8xi32, #tpu.memory_space<smem>>, %arg3: memref<1x8x1xf32, #tpu.memory_space<vmem>>, %arg4: memref<64x128xf32, #tpu.memory_space<any>>, %arg5: memref<8x128xf32, #tpu.memory_space<vmem>>, %arg6: memref<4x128xf32, #tpu.memory_space<vmem>>, %arg7: memref<4x128xf32, #tpu.memory_space<vmem>>, %arg8: memref<4x128xf32, #tpu.memory_space<vmem>>, %arg9: memref<1x8x128xf32, #tpu.memory_space<vmem>>, %arg10: memref<16x128xf32, #tpu.memory_space<vmem>>, %arg11: memref<2x!tpu.dma_semaphore, #tpu.memory_space<semaphore_mem>>) attributes {dimension_semantics = [#tpu.dimension_semantics<parallel>, #tpu.dimension_semantics<arbitrary>], iteration_bounds = array<i64: 1, 2>, scalar_prefetch = 1 : i64, scratch_operands = 2 : i64, tpu.core_type = #tpu.core_type<tc>, window_params = [{transform_indices = @transform_0, window_bounds = array<i64: 1, 8, 1>}, {}, {transform_indices = @transform_2, window_bounds = array<i64: 8, 128>}, {pipeline_mode = #tpu.pipeline_mode<synchronous>, transform_indices = @transform_3, window_bounds = array<i64: 4, 128>}, {pipeline_mode = #tpu.pipeline_mode<synchronous>, transform_indices = @transform_4, window_bounds = array<i64: 4, 128>}, {pipeline_mode = #tpu.pipeline_mode<synchronous>, transform_indices = @transform_5, window_bounds = array<i64: 4, 128>}, {transform_indices = @transform_6, window_bounds = array<i64: 1, 8, 128>}]} {
    %c8_i32 = arith.constant 8 : i32
    %0 = arith.muli %arg0, %c8_i32 : i32
    %c2_i32 = arith.constant 2 : i32
    %c0_i32 = arith.constant 0 : i32
    %1 = arith.cmpi eq, %c2_i32, %c0_i32 : i32
    %c1_i32 = arith.constant 1 : i32
    %2 = arith.select %1, %c1_i32, %c2_i32 : i32
    %3 = arith.remsi %arg1, %2 : i32
    %c0_i32_0 = arith.constant 0 : i32
    %4 = arith.cmpi ne, %3, %c0_i32_0 : i32
    %c0_i32_1 = arith.constant 0 : i32
    %5 = arith.cmpi slt, %3, %c0_i32_1 : i32
    %c0_i32_2 = arith.constant 0 : i32
    %6 = arith.cmpi slt, %2, %c0_i32_2 : i32
    %7 = arith.xori %5, %6 : i1
    %8 = arith.andi %7, %4 : i1
    %9 = arith.addi %3, %2 : i32
    %10 = arith.select %8, %9, %3 : i32
    %c0_i32_3 = arith.constant 0 : i32
    %11 = arith.cmpi eq, %arg1, %c0_i32_3 : i32
    %12 = arith.extui %11 : i1 to i32
    %c0_i32_4 = arith.constant 0 : i32
    %13 = arith.cmpi ne, %12, %c0_i32_4 : i32
    scf.if %13 {
      %c0_i32_41 = arith.constant 0 : i32
      %c8_i32_42 = arith.constant 8 : i32
      %90 = arith.addi %c0_i32_41, %c8_i32_42 : i32
      %c1_i32_43 = arith.constant 1 : i32
      scf.for %arg12 = %c0_i32_41 to %90 step %c1_i32_43  : i32 {
        %c1_i32_45 = arith.constant 1 : i32
        %91 = arith.muli %arg12, %c1_i32_45 : i32
        %c0_i32_46 = arith.constant 0 : i32
        %92 = arith.addi %c0_i32_46, %91 : i32
        %93 = arith.addi %0, %92 : i32
        %c0_47 = arith.constant 0 : index
        %94 = arith.index_cast %93 : i32 to index
        %95 = memref.load %arg2[%c0_47, %94] : memref<2x8xi32, #tpu.memory_space<smem>>
        %c0_i32_48 = arith.constant 0 : i32
        %96 = arith.addi %c0_i32_48, %92 : i32
        %c0_i32_49 = arith.constant 0 : i32
        %c0_i32_50 = arith.constant 0 : i32
        %97 = tpu.memref_slice %arg4[%95, %c0_i32_50] : memref<64x128xf32, #tpu.memory_space<any>> -> memref<1x128xf32, #tpu.memory_space<any>>
        %c0_i32_51 = arith.constant 0 : i32
        %98 = tpu.memref_slice %arg10[%96, %c0_i32_51] : memref<16x128xf32, #tpu.memory_space<vmem>> -> memref<1x128xf32, #tpu.memory_space<vmem>>
        %99 = tpu.memref_slice %arg11[%c0_i32_49] : memref<2x!tpu.dma_semaphore, #tpu.memory_space<semaphore_mem>> -> memref<1x!tpu.dma_semaphore, #tpu.memory_space<semaphore_mem>>
        %100 = tpu.memref_squeeze %99 : memref<1x!tpu.dma_semaphore, #tpu.memory_space<semaphore_mem>> -> memref<!tpu.dma_semaphore, #tpu.memory_space<semaphore_mem>>
        tpu.enqueue_dma source(%97 : memref<1x128xf32, #tpu.memory_space<any>>) target(%98 : memref<1x128xf32, #tpu.memory_space<vmem>>) target_semaphore(%100 : memref<!tpu.dma_semaphore, #tpu.memory_space<semaphore_mem>>)
      }
      %c8_i32_44 = arith.constant 8 : i32
    } else {
    }
    %c1_i32_5 = arith.constant 1 : i32
    %14 = arith.addi %arg1, %c1_i32_5 : i32
    %c2_i32_6 = arith.constant 2 : i32
    %15 = arith.cmpi slt, %14, %c2_i32_6 : i32
    %16 = arith.extui %15 : i1 to i32
    %c0_i32_7 = arith.constant 0 : i32
    %17 = arith.cmpi ne, %16, %c0_i32_7 : i32
    scf.if %17 {
      %c1_i32_41 = arith.constant 1 : i32
      %90 = arith.addi %arg1, %c1_i32_41 : i32
      %c1_i32_42 = arith.constant 1 : i32
      %91 = arith.subi %c1_i32_42, %10 : i32
      %c8_i32_43 = arith.constant 8 : i32
      %92 = arith.muli %91, %c8_i32_43 : i32
      %c0_i32_44 = arith.constant 0 : i32
      %c8_i32_45 = arith.constant 8 : i32
      %93 = arith.addi %c0_i32_44, %c8_i32_45 : i32
      %c1_i32_46 = arith.constant 1 : i32
      scf.for %arg12 = %c0_i32_44 to %93 step %c1_i32_46  : i32 {
        %c1_i32_48 = arith.constant 1 : i32
        %94 = arith.muli %arg12, %c1_i32_48 : i32
        %c0_i32_49 = arith.constant 0 : i32
        %95 = arith.addi %c0_i32_49, %94 : i32
        %96 = arith.addi %0, %95 : i32
        %97 = arith.index_cast %90 : i32 to index
        %98 = arith.index_cast %96 : i32 to index
        %99 = memref.load %arg2[%97, %98] : memref<2x8xi32, #tpu.memory_space<smem>>
        %100 = arith.addi %92, %95 : i32
        %c0_i32_50 = arith.constant 0 : i32
        %101 = tpu.memref_slice %arg4[%99, %c0_i32_50] : memref<64x128xf32, #tpu.memory_space<any>> -> memref<1x128xf32, #tpu.memory_space<any>>
        %c0_i32_51 = arith.constant 0 : i32
        %102 = tpu.memref_slice %arg10[%100, %c0_i32_51] : memref<16x128xf32, #tpu.memory_space<vmem>> -> memref<1x128xf32, #tpu.memory_space<vmem>>
        %103 = tpu.memref_slice %arg11[%91] : memref<2x!tpu.dma_semaphore, #tpu.memory_space<semaphore_mem>> -> memref<1x!tpu.dma_semaphore, #tpu.memory_space<semaphore_mem>>
        %104 = tpu.memref_squeeze %103 : memref<1x!tpu.dma_semaphore, #tpu.memory_space<semaphore_mem>> -> memref<!tpu.dma_semaphore, #tpu.memory_space<semaphore_mem>>
        tpu.enqueue_dma source(%101 : memref<1x128xf32, #tpu.memory_space<any>>) target(%102 : memref<1x128xf32, #tpu.memory_space<vmem>>) target_semaphore(%104 : memref<!tpu.dma_semaphore, #tpu.memory_space<semaphore_mem>>)
      }
      %c8_i32_47 = arith.constant 8 : i32
    } else {
    }
    %c8_i32_8 = arith.constant 8 : i32
    %18 = arith.muli %10, %c8_i32_8 : i32
    %c0_i32_9 = arith.constant 0 : i32
    %19 = tpu.memref_slice %arg10[%18, %c0_i32_9] : memref<16x128xf32, #tpu.memory_space<vmem>> -> memref<8x128xf32, #tpu.memory_space<vmem>>
    %c0_i32_10 = arith.constant 0 : i32
    %20 = tpu.memref_slice %arg10[%18, %c0_i32_10] : memref<16x128xf32, #tpu.memory_space<vmem>> -> memref<8x128xf32, #tpu.memory_space<vmem>>
    %21 = tpu.memref_slice %arg11[%10] : memref<2x!tpu.dma_semaphore, #tpu.memory_space<semaphore_mem>> -> memref<1x!tpu.dma_semaphore, #tpu.memory_space<semaphore_mem>>
    %22 = tpu.memref_squeeze %21 : memref<1x!tpu.dma_semaphore, #tpu.memory_space<semaphore_mem>> -> memref<!tpu.dma_semaphore, #tpu.memory_space<semaphore_mem>>
    tpu.wait_dma2 semaphore(%22 : memref<!tpu.dma_semaphore, #tpu.memory_space<semaphore_mem>>) src(%19 : memref<8x128xf32, #tpu.memory_space<vmem>>) dst(%20 : memref<8x128xf32, #tpu.memory_space<vmem>>)
    %c0 = arith.constant 0 : index
    %c0_11 = arith.constant 0 : index
    %c0_12 = arith.constant 0 : index
    %23 = vector.load %arg3[%c0, %c0_11, %c0_12] : memref<1x8x1xf32, #tpu.memory_space<vmem>>, vector<1x8x1xf32>
    %24 = vector.shape_cast %23 : vector<1x8x1xf32> to vector<8x1xf32>
    %c0_13 = arith.constant 0 : index
    %c0_14 = arith.constant 0 : index
    %25 = vector.load %arg5[%c0_13, %c0_14] : memref<8x128xf32, #tpu.memory_space<vmem>>, vector<8x128xf32>
    %c0_15 = arith.constant 0 : index
    %c0_16 = arith.constant 0 : index
    %26 = vector.load %arg6[%c0_15, %c0_16] : memref<4x128xf32, #tpu.memory_space<vmem>>, vector<1x128xf32>
    %27 = vector.broadcast %24 : vector<8x1xf32> to vector<8x128xf32>
    %28 = vector.broadcast %26 : vector<1x128xf32> to vector<8x128xf32>
    %29 = arith.mulf %27, %28 : vector<8x128xf32>
    %30 = math.sin %29 : vector<8x128xf32>
    %c0_17 = arith.constant 0 : index
    %c0_18 = arith.constant 0 : index
    %31 = vector.load %arg7[%c0_17, %c0_18] : memref<4x128xf32, #tpu.memory_space<vmem>>, vector<1x128xf32>
    %32 = vector.broadcast %31 : vector<1x128xf32> to vector<8x128xf32>
    %33 = arith.mulf %30, %32 : vector<8x128xf32>
    %34 = arith.addf %25, %33 : vector<8x128xf32>
    %35 = math.cos %29 : vector<8x128xf32>
    %c0_19 = arith.constant 0 : index
    %c0_20 = arith.constant 0 : index
    %36 = vector.load %arg8[%c0_19, %c0_20] : memref<4x128xf32, #tpu.memory_space<vmem>>, vector<1x128xf32>
    %37 = vector.broadcast %36 : vector<1x128xf32> to vector<8x128xf32>
    %38 = arith.mulf %35, %37 : vector<8x128xf32>
    %39 = arith.addf %34, %38 : vector<8x128xf32>
    %c1 = arith.constant 1 : index
    %c0_21 = arith.constant 0 : index
    %40 = vector.load %arg6[%c1, %c0_21] : memref<4x128xf32, #tpu.memory_space<vmem>>, vector<1x128xf32>
    %41 = vector.broadcast %24 : vector<8x1xf32> to vector<8x128xf32>
    %42 = vector.broadcast %40 : vector<1x128xf32> to vector<8x128xf32>
    %43 = arith.mulf %41, %42 : vector<8x128xf32>
    %44 = math.sin %43 : vector<8x128xf32>
    %c1_22 = arith.constant 1 : index
    %c0_23 = arith.constant 0 : index
    %45 = vector.load %arg7[%c1_22, %c0_23] : memref<4x128xf32, #tpu.memory_space<vmem>>, vector<1x128xf32>
    %46 = vector.broadcast %45 : vector<1x128xf32> to vector<8x128xf32>
    %47 = arith.mulf %44, %46 : vector<8x128xf32>
    %48 = arith.addf %39, %47 : vector<8x128xf32>
    %49 = math.cos %43 : vector<8x128xf32>
    %c1_24 = arith.constant 1 : index
    %c0_25 = arith.constant 0 : index
    %50 = vector.load %arg8[%c1_24, %c0_25] : memref<4x128xf32, #tpu.memory_space<vmem>>, vector<1x128xf32>
    %51 = vector.broadcast %50 : vector<1x128xf32> to vector<8x128xf32>
    %52 = arith.mulf %49, %51 : vector<8x128xf32>
    %53 = arith.addf %48, %52 : vector<8x128xf32>
    %c2 = arith.constant 2 : index
    %c0_26 = arith.constant 0 : index
    %54 = vector.load %arg6[%c2, %c0_26] : memref<4x128xf32, #tpu.memory_space<vmem>>, vector<1x128xf32>
    %55 = vector.broadcast %24 : vector<8x1xf32> to vector<8x128xf32>
    %56 = vector.broadcast %54 : vector<1x128xf32> to vector<8x128xf32>
    %57 = arith.mulf %55, %56 : vector<8x128xf32>
    %58 = math.sin %57 : vector<8x128xf32>
    %c2_27 = arith.constant 2 : index
    %c0_28 = arith.constant 0 : index
    %59 = vector.load %arg7[%c2_27, %c0_28] : memref<4x128xf32, #tpu.memory_space<vmem>>, vector<1x128xf32>
    %60 = vector.broadcast %59 : vector<1x128xf32> to vector<8x128xf32>
    %61 = arith.mulf %58, %60 : vector<8x128xf32>
    %62 = arith.addf %53, %61 : vector<8x128xf32>
    %63 = math.cos %57 : vector<8x128xf32>
    %c2_29 = arith.constant 2 : index
    %c0_30 = arith.constant 0 : index
    %64 = vector.load %arg8[%c2_29, %c0_30] : memref<4x128xf32, #tpu.memory_space<vmem>>, vector<1x128xf32>
    %65 = vector.broadcast %64 : vector<1x128xf32> to vector<8x128xf32>
    %66 = arith.mulf %63, %65 : vector<8x128xf32>
    %67 = arith.addf %62, %66 : vector<8x128xf32>
    %c3 = arith.constant 3 : index
    %c0_31 = arith.constant 0 : index
    %68 = vector.load %arg6[%c3, %c0_31] : memref<4x128xf32, #tpu.memory_space<vmem>>, vector<1x128xf32>
    %69 = vector.broadcast %24 : vector<8x1xf32> to vector<8x128xf32>
    %70 = vector.broadcast %68 : vector<1x128xf32> to vector<8x128xf32>
    %71 = arith.mulf %69, %70 : vector<8x128xf32>
    %72 = math.sin %71 : vector<8x128xf32>
    %c3_32 = arith.constant 3 : index
    %c0_33 = arith.constant 0 : index
    %73 = vector.load %arg7[%c3_32, %c0_33] : memref<4x128xf32, #tpu.memory_space<vmem>>, vector<1x128xf32>
    %74 = vector.broadcast %73 : vector<1x128xf32> to vector<8x128xf32>
    %75 = arith.mulf %72, %74 : vector<8x128xf32>
    %76 = arith.addf %67, %75 : vector<8x128xf32>
    %77 = math.cos %71 : vector<8x128xf32>
    %c3_34 = arith.constant 3 : index
    %c0_35 = arith.constant 0 : index
    %78 = vector.load %arg8[%c3_34, %c0_35] : memref<4x128xf32, #tpu.memory_space<vmem>>, vector<1x128xf32>
    %79 = vector.broadcast %78 : vector<1x128xf32> to vector<8x128xf32>
    %80 = arith.mulf %77, %79 : vector<8x128xf32>
    %81 = arith.addf %76, %80 : vector<8x128xf32>
    %c0_i32_36 = arith.constant 0 : i32
    %82 = arith.addi %18, %c0_i32_36 : i32
    %83 = tpu.assume_multiple %82, 8 : i32
    %84 = arith.index_cast %83 : i32 to index
    %c0_37 = arith.constant 0 : index
    %85 = vector.load %arg10[%84, %c0_37] : memref<16x128xf32, #tpu.memory_space<vmem>>, vector<8x128xf32>
    %86 = arith.addf %81, %85 : vector<8x128xf32>
    %c0_38 = arith.constant 0 : index
    %c0_39 = arith.constant 0 : index
    %c0_40 = arith.constant 0 : index
    %87 = vector.load %arg9[%c0_38, %c0_39, %c0_40] : memref<1x8x128xf32, #tpu.memory_space<vmem>>, vector<1x8x128xf32>
    %88 = vector.shape_cast %87 : vector<1x8x128xf32> to vector<8x128xf32>
    %89 = vector.shape_cast %86 : vector<8x128xf32> to vector<1x8x128xf32>
    tpu.vector_store %arg9[%c0_38, %c0_39, %c0_40], %89 {strides = array<i32>} : memref<1x8x128xf32, #tpu.memory_space<vmem>>, vector<1x8x128xf32>,
    return
  }
  func.func @transform_0(%arg0: i32, %arg1: i32, %arg2: memref<2x8xi32, #tpu.memory_space<smem>>) -> (i32, i32, i32) {
    %c0_i32 = arith.constant 0 : i32
    %c0_i32_0 = arith.constant 0 : i32
    return %arg1, %arg0, %c0_i32 : i32, i32, i32
  }
  func.func @transform_2(%arg0: i32, %arg1: i32, %arg2: memref<2x8xi32, #tpu.memory_space<smem>>) -> (i32, i32) {
    %c0_i32 = arith.constant 0 : i32
    %c0_i32_0 = arith.constant 0 : i32
    return %arg0, %c0_i32 : i32, i32
  }
  func.func @transform_3(%arg0: i32, %arg1: i32, %arg2: memref<2x8xi32, #tpu.memory_space<smem>>) -> (i32, i32) {
    %c0_i32 = arith.constant 0 : i32
    %c0_i32_0 = arith.constant 0 : i32
    %c0_i32_1 = arith.constant 0 : i32
    return %c0_i32, %c0_i32_0 : i32, i32
  }
  func.func @transform_4(%arg0: i32, %arg1: i32, %arg2: memref<2x8xi32, #tpu.memory_space<smem>>) -> (i32, i32) {
    %c0_i32 = arith.constant 0 : i32
    %c0_i32_0 = arith.constant 0 : i32
    %c0_i32_1 = arith.constant 0 : i32
    return %c0_i32, %c0_i32_0 : i32, i32
  }
  func.func @transform_5(%arg0: i32, %arg1: i32, %arg2: memref<2x8xi32, #tpu.memory_space<smem>>) -> (i32, i32) {
    %c0_i32 = arith.constant 0 : i32
    %c0_i32_0 = arith.constant 0 : i32
    %c0_i32_1 = arith.constant 0 : i32
    return %c0_i32, %c0_i32_0 : i32, i32
  }
  func.func @transform_6(%arg0: i32, %arg1: i32, %arg2: memref<2x8xi32, #tpu.memory_space<smem>>) -> (i32, i32, i32) {
    %c0_i32 = arith.constant 0 : i32
    %c0_i32_0 = arith.constant 0 : i32
    return %arg1, %arg0, %c0_i32 : i32, i32, i32
  }
}

</mosaic_0001>

<llo_original>
// kernel: tpu_custom_call.1
$region0: #{tpu_custom_call.1}
  #allocation0 [shape = 'u32[]', space=smem, size = 0x4, offset = 0x4, fixed_abs, tag = 'smem constant byte address 0x4 - core index']
  #allocation1 [shape = 'u32[72,128]{1,0:T(1,128)}', space=vmem, size = 0x9000, scoped, tag = 'internal scratch']
  #allocation2 [shape = 'f32[16,128]{1,0:T(8,128)}', space=vmem, size = 0x2000, scoped, tag = 'scratch operand']
  #allocation3 [shape = 's32[2]{0}', space=sflag, size = 0x8, scoped, tag = 'scratch operand']
  #allocation4 [shape = 's32[1]{0}', space=sflag, size = 0x4, scoped, tag = 'scoped memory for tpu_custom_call.1']
  #allocation5 [shape = 'u8[1024]{0}', space=smem, size = 0x400, scoped, tag = 'prefetched SMEM operand 0']
  #allocation8 [shape = 's32[]', space=sflag, size = 0x4, offset = 0, fixed_abs, tag = 'sflag constant byte address 0x0 - dummy sync flag']
  #allocation9 [shape = 's32[]', space=sflag, size = 0x4, offset = 0, fixed_abs, tag = 'sflag constant byte address 0x0 - dummy sync flag']
  #allocation10 [shape = 'u32[]', space=smem, size = 0x4, offset = 0x44, fixed_abs, tag = 'smem constant byte address 0x44 - assertion arg 0']
  #allocation11 [shape = 'u32[]', space=smem, size = 0x4, offset = 0x48, fixed_abs, tag = 'smem constant byte address 0x48 - assertion arg 1']
  #allocation12 [shape = 's32[]', space=sflag, size = 0x4, offset = 0, fixed_abs, tag = 'sflag constant byte address 0x0 - dummy sync flag']
  #allocation13 [shape = 's32[]', space=sflag, size = 0x4, offset = 0, fixed_abs, tag = 'sflag constant byte address 0x0 - dummy sync flag']
  %s0 = inlined_call_operand.hbm [shape: s32[2,8], index: 0, kind: input, shape index: {}]
  %s1 = inlined_call_operand.vmem [shape: f32[2,8,1], index: 1, kind: input, shape index: {}]
  %s2 = inlined_call_operand.hbm [shape: f32[64,128], index: 2, kind: input, shape index: {}]
  %s3 = inlined_call_operand.vmem [shape: f32[8,128], index: 3, kind: input, shape index: {}]
  %s4 = inlined_call_operand.vmem [shape: f32[4,128], index: 4, kind: input, shape index: {}]
  %s5 = inlined_call_operand.vmem [shape: f32[4,128], index: 5, kind: input, shape index: {}]
  %s6 = inlined_call_operand.vmem [shape: f32[4,128], index: 6, kind: input, shape index: {}]
  %s7 = inlined_call_operand.hbm [shape: f32[2,8,128], index: 7, kind: output, shape index: {}]
  %s8 = sld [smem:[#allocation0]]
  $region83: #{tpu_custom_call.1} parent=0
    _
  %s10 = ssub.s32 1, %s8
  %s11 = scalar_select 0, %s10, %s8
  %s13 = sshll.u32 %s0, 4
  %s14 = int_to_ptr.hbm [resolvable:$true] %s13
  %16 = dma.hbm_to_smem %s14, 32, [#allocation5], [#allocation4]
  %18 = dma.done [#allocation4], 32
  %19 = sfence
  $region1: #{tpu_custom_call.1} parent=0
    #allocation6 [shape = 'u8[8192]{0}', space=vmem, size = 0x2000, scoped, tag = 'output window, operand 0']
    #allocation7 [shape = 's32[2]{0}', space=sflag, size = 0x8, scoped, tag = 'scoped memory for tpu_custom_call.1']
    %20 = vsyncpa [#allocation7], 0
    %s21 = scalar_lea.sflag [#allocation7], 1
    %22 = vsyncpa %s21, 0
    loop: start=0, step=1, limit=4
    $region2: #{tpu_custom_call.1} parent=1 // loop_pre_header
      _
    $region3: #{tpu_custom_call.1} parent=1 // loop_header
      %s24 = sphi 0, %s28
      %p25 = scmp.ge.s32.totalorder %s24, 4
      %s31 = sphi 0, %s43
      %s32 = sphi 0, %s39
      %s33 = sphi 0, %s31
      %s34 = sphi 0, %s32
      %s35 = sphi 0, %s33
      %s36 = sphi 0, %s34
      %s48 = sphi 0, %s50
      %s51 = sphi 0, %s48
      %s52 = sphi 0, %s51
      %s68 = sphi 0, %s52
      %s74 = sphi 0, %s76
      %s77 = sphi 0, %s74
      %s78 = sphi 0, %s77
      %s94 = sphi 0, %s78
      %s98 = sphi 0, %s98
      %s100 = sphi 0, %s98
      %s101 = sphi 0, %s100
      %s115 = sphi 0, %s101
      %s119 = sphi 0, %s119
      %s121 = sphi 0, %s119
      %s122 = sphi 0, %s121
      %s136 = sphi 0, %s122
      %s140 = sphi 0, %s140
      %s142 = sphi 0, %s140
      %s143 = sphi 0, %s142
      %s157 = sphi 0, %s143
      %s165 = sphi 0, %s167
      %s168 = sphi 0, %s165
      %s169 = sphi 0, %s168
      %s185 = sphi 0, %s169
    $region4: #{tpu_custom_call.1} parent=1 // loop_header_branch
      %27 = sbr.rel (%p25) target = $region8
    $region5: #{tpu_custom_call.1} parent=1 // loop_body
      %s29 = ssub.s32 %s24, 1
      %s30 = ssub.s32 %s24, 2
      %s37 = sadd.s32 1, %s32
      %p38 = scmp.ge.s32.totalorder %s37, 2
      %s39 = scalar_select %p38, 0, %s37
      %s40 = sadd.s32 1, %s31
      %s41 = scalar_select %p38, %s40, %s31
      %p42 = scmp.ge.s32.totalorder %s41, 1
      %s43 = scalar_select %p42, 0, %s41
      %s44 = ssub.s32 %s32, %s39
      %s45 = ssub.s32 %s31, %s43
      %s46 = sor.u32 %s44, %s45
      %p47 = scmp.eq.s32.totalorder %s46, 0
      %s49 = sadd.s32 %s48, 1
      %s50 = scalar_select %p47, %s48, %s49
      %p53 = pneg %p47
      %p54 = scmp.eq.s32.totalorder %s24, 1
      %p55 = por %p53, %p54
      %p56 = scmp.ne.s32.totalorder %s48, %s51
      %p57 = scmp.eq.s32.totalorder %s24, 0
      %p58 = por %p56, %p57
      %p59 = scmp.ne.s32.totalorder %s48, %s51
      %p60 = scmp.eq.s32.totalorder %s29, 1
      %p61 = por %p59, %p60
      %p62 = scmp.ne.s32.totalorder %s51, %s52
      %p63 = scmp.eq.s32.totalorder %s29, 0
      %p64 = por %p62, %p63
      %p65 = scmp.ne.s32.totalorder %s51, %s52
      %p66 = scmp.eq.s32.totalorder %s30, 1
      %p67 = por %p65, %p66
      %p69 = scmp.ne.s32.totalorder %s52, %s68
      %p70 = scmp.eq.s32.totalorder %s30, 0
      %p71 = por %p69, %p70
      %s72 = ssub.s32 %s31, %s43
      %p73 = scmp.eq.s32.totalorder %s72, 0
      %s75 = sadd.s32 %s74, 1
      %s76 = scalar_select %p73, %s74, %s75
      %p79 = pneg %p73
      %p80 = scmp.eq.s32.totalorder %s24, 1
      %p81 = por %p79, %p80
      %p82 = scmp.ne.s32.totalorder %s74, %s77
      %p83 = scmp.eq.s32.totalorder %s24, 0
      %p84 = por %p82, %p83
      %p85 = scmp.ne.s32.totalorder %s74, %s77
      %p86 = scmp.eq.s32.totalorder %s29, 1
      %p87 = por %p85, %p86
      %p88 = scmp.ne.s32.totalorder %s77, %s78
      %p89 = scmp.eq.s32.totalorder %s29, 0
      %p90 = por %p88, %p89
      %p91 = scmp.ne.s32.totalorder %s77, %s78
      %p92 = scmp.eq.s32.totalorder %s30, 1
      %p93 = por %p91, %p92
      %p95 = scmp.ne.s32.totalorder %s78, %s94
      %p96 = scmp.eq.s32.totalorder %s30, 0
      %p97 = por %p95, %p96
      %s99 = sadd.s32 %s98, 1
      %p102 = scmp.eq.s32.totalorder %s24, 1
      %p103 = scmp.ne.s32.totalorder %s98, %s100
      %p104 = scmp.eq.s32.totalorder %s24, 0
      %p105 = por %p103, %p104
      %p106 = scmp.ne.s32.totalorder %s98, %s100
      %p107 = scmp.eq.s32.totalorder %s29, 1
      %p108 = por %p106, %p107
      %p109 = scmp.ne.s32.totalorder %s100, %s101
      %p110 = scmp.eq.s32.totalorder %s29, 0
      %p111 = por %p109, %p110
      %p112 = scmp.ne.s32.totalorder %s100, %s101
      %p113 = scmp.eq.s32.totalorder %s30, 1
      %p114 = por %p112, %p113
      %p116 = scmp.ne.s32.totalorder %s101, %s115
      %p117 = scmp.eq.s32.totalorder %s30, 0
      %p118 = por %p116, %p117
      %s120 = sadd.s32 %s119, 1
      %p123 = scmp.eq.s32.totalorder %s24, 1
      %p124 = scmp.ne.s32.totalorder %s119, %s121
      %p125 = scmp.eq.s32.totalorder %s24, 0
      %p126 = por %p124, %p125
      %p127 = scmp.ne.s32.totalorder %s119, %s121
      %p128 = scmp.eq.s32.totalorder %s29, 1
      %p129 = por %p127, %p128
      %p130 = scmp.ne.s32.totalorder %s121, %s122
      %p131 = scmp.eq.s32.totalorder %s29, 0
      %p132 = por %p130, %p131
      %p133 = scmp.ne.s32.totalorder %s121, %s122
      %p134 = scmp.eq.s32.totalorder %s30, 1
      %p135 = por %p133, %p134
      %p137 = scmp.ne.s32.totalorder %s122, %s136
      %p138 = scmp.eq.s32.totalorder %s30, 0
      %p139 = por %p137, %p138
      %s141 = sadd.s32 %s140, 1
      %p144 = scmp.eq.s32.totalorder %s24, 1
      %p145 = scmp.ne.s32.totalorder %s140, %s142
      %p146 = scmp.eq.s32.totalorder %s24, 0
      %p147 = por %p145, %p146
      %p148 = scmp.ne.s32.totalorder %s140, %s142
      %p149 = scmp.eq.s32.totalorder %s29, 1
      %p150 = por %p148, %p149
      %p151 = scmp.ne.s32.totalorder %s142, %s143
      %p152 = scmp.eq.s32.totalorder %s29, 0
      %p153 = por %p151, %p152
      %p154 = scmp.ne.s32.totalorder %s142, %s143
      %p155 = scmp.eq.s32.totalorder %s30, 1
      %p156 = por %p154, %p155
      %p158 = scmp.ne.s32.totalorder %s143, %s157
      %p159 = scmp.eq.s32.totalorder %s30, 0
      %p160 = por %p158, %p159
      %s161 = ssub.s32 %s32, %s39
      %s162 = ssub.s32 %s31, %s43
      %s163 = sor.u32 %s161, %s162
      %p164 = scmp.eq.s32.totalorder %s163, 0
      %s166 = sadd.s32 %s165, 1
      %s167 = scalar_select %p164, %s165, %s166
      %p170 = pneg %p164
      %p171 = scmp.eq.s32.totalorder %s24, 1
      %p172 = por %p170, %p171
      %p173 = scmp.ne.s32.totalorder %s165, %s168
      %p174 = scmp.eq.s32.totalorder %s24, 0
      %p175 = por %p173, %p174
      %p176 = scmp.ne.s32.totalorder %s165, %s168
      %p177 = scmp.eq.s32.totalorder %s29, 1
      %p178 = por %p176, %p177
      %p179 = scmp.ne.s32.totalorder %s168, %s169
      %p180 = scmp.eq.s32.totalorder %s29, 0
      %p181 = por %p179, %p180
      %p182 = scmp.ne.s32.totalorder %s168, %s169
      %p183 = scmp.eq.s32.totalorder %s30, 1
      %p184 = por %p182, %p183
      %p186 = scmp.ne.s32.totalorder %s169, %s185
      %p187 = scmp.eq.s32.totalorder %s30, 0
      %p188 = por %p186, %p187
      %p189 = scmp.le.s32.totalorder 1, %s24
      %p190 = scmp.lt.s32.totalorder %s24, 3
      %p191 = pnand %p189, %p190
      %p192 = pneg %p191
      // Predicated region
      $region9: #{tpu_custom_call.1} parent=5 // pred_check
        _
      $region10: #{tpu_custom_call.1} parent=5 // pred_check_branch
        %194 = sbr.rel (%p191) target = $region12
      $region11: #{tpu_custom_call.1} parent=5 // pred_region
        %s195 = ssub.s32 %s24, 1
        // Predicated region
        $region13: #{tpu_custom_call.1} parent=11 // pred_check
          %p196 = pneg %p90
        $region14: #{tpu_custom_call.1} parent=11 // pred_check_branch
          %198 = sbr.rel (%p196) target = $region16
        $region15: #{tpu_custom_call.1} parent=11 // pred_region
          %p199 = scmp.lt.s32.totalorder %s33, 0
          %s200 = scalar_select %p199, %s33, 0
          %s201 = smul.addr %s200, 8
          %s202 = scalar_lea.vmem %s3, %s201
        $region16: #{tpu_custom_call.1} parent=11 // pred_fallthru
          _
        // Predicated region
        $region17: #{tpu_custom_call.1} parent=11 // pred_check
          %p203 = pneg %p111
        $region18: #{tpu_custom_call.1} parent=11 // pred_check_branch
          %205 = sbr.rel (%p203) target = $region20
        $region19: #{tpu_custom_call.1} parent=11 // pred_region
          _
        $region20: #{tpu_custom_call.1} parent=11 // pred_fallthru
          _
        // Predicated region
        $region21: #{tpu_custom_call.1} parent=11 // pred_check
          %p206 = pneg %p132
        $region22: #{tpu_custom_call.1} parent=11 // pred_check_branch
          %208 = sbr.rel (%p206) target = $region24
        $region23: #{tpu_custom_call.1} parent=11 // pred_region
          _
        $region24: #{tpu_custom_call.1} parent=11 // pred_fallthru
          _
        // Predicated region
        $region25: #{tpu_custom_call.1} parent=11 // pred_check
          %p209 = pneg %p153
        $region26: #{tpu_custom_call.1} parent=11 // pred_check_branch
          %211 = sbr.rel (%p209) target = $region28
        $region27: #{tpu_custom_call.1} parent=11 // pred_region
          _
        $region28: #{tpu_custom_call.1} parent=11 // pred_fallthru
          _
      $region12: #{tpu_custom_call.1} parent=5 // pred_fallthru
        _
      %p212 = scmp.lt.s32.totalorder %s24, 2
      // Predicated region
      $region29: #{tpu_custom_call.1} parent=5 // pred_check
        %p213 = pneg %p212
      $region30: #{tpu_custom_call.1} parent=5 // pred_check_branch
        %215 = sbr.rel (%p213) target = $region32
      $region31: #{tpu_custom_call.1} parent=5 // pred_region
        // Predicated region
        $region33: #{tpu_custom_call.1} parent=31 // pred_check
          %p216 = pneg %p58
        $region34: #{tpu_custom_call.1} parent=31 // pred_check_branch
          %218 = sbr.rel (%p216) target = $region36
        $region35: #{tpu_custom_call.1} parent=31 // pred_region
          %p219 = scmp.lt.s32.totalorder %s32, 1
          %s220 = scalar_select %p219, %s32, 1
          %p221 = scmp.lt.s32.totalorder %s31, 0
          %s222 = scalar_select %p221, %s31, 0
          %s223 = sadd.s32 %s222, %s220
          %s224 = smul.addr %s223, 8
          %s225 = scalar_lea.vmem %s1, %s224
        $region36: #{tpu_custom_call.1} parent=31 // pred_fallthru
          _
      $region32: #{tpu_custom_call.1} parent=5 // pred_fallthru
        _
      %p226 = scmp.le.s32.totalorder 1, %s24
      %p227 = scmp.lt.s32.totalorder %s24, 3
      %p228 = pnand %p226, %p227
      %p229 = pneg %p228
      // Predicated region
      $region37: #{tpu_custom_call.1} parent=5 // pred_check
        _
      $region38: #{tpu_custom_call.1} parent=5 // pred_check_branch
        %231 = sbr.rel (%p228) target = $region40
      $region39: #{tpu_custom_call.1} parent=5 // pred_region
        %s232 = ssub.s32 %s24, 1
        %p233 = scmp.lt.s32.totalorder %s34, 1
        %s234 = scalar_select %p233, %s34, 1
        %p235 = scmp.lt.s32.totalorder %s33, 0
        %s236 = scalar_select %p235, %s33, 0
        %s237 = sadd.s32 %s236, %s234
        %s238 = smul.addr %s237, 8
        %s239 = scalar_lea.vmem %s1, %s238
        %p240 = pneg %p64
        %p241 = pneg %p61
        %p242 = scmp.lt.s32.totalorder %s33, 0
        %s243 = scalar_select %p242, %s33, 0
        %s244 = smul.addr %s243, 8
        %s245 = scalar_lea.vmem %s3, %s244
        %p246 = pneg %p90
        %p247 = pneg %p87
        %p248 = pneg %p111
        %p249 = pneg %p108
        %p250 = pneg %p132
        %p251 = pneg %p129
        %p252 = pneg %p153
        %p253 = pneg %p150
        %p254 = pneg %p181
        %p255 = pneg %p178
        %s256 = sand.u32 %s168, 1
        %s257 = scalar_lea.sflag [#allocation7], %s256
        %s258 = sand.u32 %s168, 1
        %s259 = smul.addr %s258, 8
        %s260 = scalar_lea.vmem [#allocation6], %s259
        %p261 = scmp.lt.s32.totalorder %s34, 1
        %s262 = scalar_select %p261, %s34, 1
        %p263 = scmp.lt.s32.totalorder %s33, 0
        %s264 = scalar_select %p263, %s33, 0
        %s265 = sadd.s32 %s264, %s262
        %s266 = smul.addr %s265, 8
        %s267 = scalar_lea.vmem %s1, %s266
        %p268 = scmp.lt.s32.totalorder %s33, 0
        %s269 = scalar_select %p268, %s33, 0
        %s270 = smul.addr %s269, 8
        %s271 = scalar_lea.vmem %s3, %s270
        %s272 = smul.u32 %s33, 8
        %p273 = scmp.lt.s32.totalorder %s34, 0
        %s274 = ssub.s32 0, %s34
        %s275 = scalar_select %p273, %s274, %s34
        %s276 = sand.u32 %s275, 1
        %s277 = ssub.s32 0, %s276
        %s278 = scalar_select %p273, %s277, %s276
        %p279 = scmp.ne.s32.totalorder %s278, 0
        %p280 = scmp.lt.s32.totalorder %s278, 0
        %p281 = pnand %p280, %p279
        %p282 = pneg %p281
        %s283 = sadd.s32 %s278, 2
        %s284 = scalar_select %p282, %s283, %s278
        %p285 = scmp.eq.s32.totalorder %s34, 0
        // Predicated region
        $region41: #{tpu_custom_call.1} parent=39 // pred_check
          %p286 = pneg %p285
        $region42: #{tpu_custom_call.1} parent=39 // pred_check_branch
          %288 = sbr.rel (%p286) target = $region44
        $region43: #{tpu_custom_call.1} parent=39 // pred_region
          loop: start=0, step=1, limit=8
          $region45: #{tpu_custom_call.1} parent=43 // loop_pre_header
            _
          $region46: #{tpu_custom_call.1} parent=43 // loop_header
            %s290 = sphi 0, %s294
            %p291 = scmp.ge.s32.totalorder %s290, 8
          $region47: #{tpu_custom_call.1} parent=43 // loop_header_branch
            %293 = sbr.rel (%p291) target = $region51
          $region48: #{tpu_custom_call.1} parent=43 // loop_body
            %s295 = sadd.s32 %s272, %s290
            %s296 = sld [smem:[#allocation5 + %s295]]
            %s297 = scalar_lea.hbm %s2, %s296
            %s298 = scalar_lea.vmem [#allocation2], %s290
            // Predicated region
            $region52: #{tpu_custom_call.1} parent=48 // pred_check
              _
            $region53: #{tpu_custom_call.1} parent=48 // pred_check_branch
              %300 = sbr.rel target = $region55
            $region54: #{tpu_custom_call.1} parent=48 // pred_region
              %301 = sst [smem:[#allocation10]] [#allocation9]
              %302 = sst [smem:[#allocation11]] [#allocation8]
            $region55: #{tpu_custom_call.1} parent=48 // pred_fallthru
              _
            %304 = shalt.err (0)
            %s306 = sshll.u32 %s297, 4
            %s307 = int_to_ptr.hbm [resolvable:$true] %s306
            %s308 = sshll.u32 %s298, 4
            %s309 = int_to_ptr.vmem [resolvable:$true] %s308
            %311 = dma.hbm_to_vmem [thread:$0]  %s307, 16, %s309, [#allocation3]
          $region49: #{tpu_custom_call.1} parent=43 // loop_footer
            %s294 = sadd.s32 1, %s290
          $region50: #{tpu_custom_call.1} parent=43 // loop_footer_branch
            %289 = sbr.rel target = $region46
          $region51: #{tpu_custom_call.1} parent=43 // loop_exit
            _
        $region44: #{tpu_custom_call.1} parent=39 // pred_fallthru
          _
        %s312 = sadd.s32 %s34, 1
        %p313 = scmp.lt.s32.totalorder %s312, 2
        // Predicated region
        $region56: #{tpu_custom_call.1} parent=39 // pred_check
          %p314 = pneg %p313
        $region57: #{tpu_custom_call.1} parent=39 // pred_check_branch
          %316 = sbr.rel (%p314) target = $region59
        $region58: #{tpu_custom_call.1} parent=39 // pred_region
          %s317 = ssub.s32 1, %s284
          %s318 = smul.u32 %s317, 8
          loop: start=0, step=1, limit=8
          $region60: #{tpu_custom_call.1} parent=58 // loop_pre_header
            _
          $region61: #{tpu_custom_call.1} parent=58 // loop_header
            %s320 = sphi 0, %s324
            %p321 = scmp.ge.s32.totalorder %s320, 8
          $region62: #{tpu_custom_call.1} parent=58 // loop_header_branch
            %323 = sbr.rel (%p321) target = $region66
          $region63: #{tpu_custom_call.1} parent=58 // loop_body
            %s325 = sadd.s32 %s272, %s320
            %s326 = sshra.s32 %s325, 7
            %s327 = sand.u32 %s325, 127
            %s328 = sadd.s32 %s326, %s312
            %s329 = smul.u32 %s328, 128
            %s330 = sshra.s32 %s325, 7
            %s331 = sand.u32 %s325, 127
            %s332 = sadd.s32 %s329, %s331
            %s333 = sld [smem:[#allocation5 + %s332]]
            %s334 = sadd.s32 %s318, %s320
            %s335 = scalar_lea.hbm %s2, %s333
            %s336 = scalar_lea.vmem [#allocation2], %s334
            %s337 = scalar_lea.sflag [#allocation3], %s317
            // Predicated region
            $region67: #{tpu_custom_call.1} parent=63 // pred_check
              _
            $region68: #{tpu_custom_call.1} parent=63 // pred_check_branch
              %339 = sbr.rel target = $region70
            $region69: #{tpu_custom_call.1} parent=63 // pred_region
              %340 = sst [smem:[#allocation10]] [#allocation13]
              %341 = sst [smem:[#allocation11]] [#allocation12]
            $region70: #{tpu_custom_call.1} parent=63 // pred_fallthru
              _
            %343 = shalt.err (0)
            %s345 = sshll.u32 %s335, 4
            %s346 = int_to_ptr.hbm [resolvable:$true] %s345
            %s347 = sshll.u32 %s336, 4
            %s348 = int_to_ptr.vmem [resolvable:$true] %s347
            %350 = dma.hbm_to_vmem [thread:$0]  %s346, 16, %s348, %s337
          $region64: #{tpu_custom_call.1} parent=58 // loop_footer
            %s324 = sadd.s32 1, %s320
          $region65: #{tpu_custom_call.1} parent=58 // loop_footer_branch
            %319 = sbr.rel target = $region61
          $region66: #{tpu_custom_call.1} parent=58 // loop_exit
            _
        $region59: #{tpu_custom_call.1} parent=39 // pred_fallthru
          _
        %s351 = smul.u32 %s284, 8
        %s352 = scalar_lea.sflag [#allocation3], %s284
        %s353 = smul.u32 8, 1
        %s354 = sshll.u32 %s353, 4
        %355 = dma.done %s352, %s354
        %v356 = vld [vmem:[%s267] sm:$0xff]
        %v357 = vld [vmem:[%s271] sm:$0xff]
        %v358 = vld [vmem:[%s4] sm:$0x1]
        %360 = vset.pattern.permute.xlu0 0
        %361 = vperm.xlu0 %360, %v356
        %v362 = vpop.permute.xlu0 %361
        %v364 = vperm.slane %v358, 0
        %v365 = vmul.f32 %v362, %v364
        %v366 = vand.u32 2147483647, %v365
        %vm367 = vcmp.le.f32.partialorder %v366, 0.7853982
        %vm368 = vcmp.lt.s32.totalorder %v365, 0
        %v369 = vand.u32 %v365, 2139095040
        %v370 = vshrl.u32 %v369, 23
        %v371 = vsub.s32 %v370, 127
        %v372 = vand.u32 2147483647, %v365
        %v373 = vand.u32 %v372, 8388607
        %v374 = vor.u32 %v373, 8388608
        %v375 = vsub.s32 0, %v374
        %v376 = vadd.s32 %v371, 1
        %vm377 = vcmp.gt.s32.totalorder %v376, 0
        %v378 = vsel %vm377, %v376, 0
        %v379 = vshrl.u32 %v378, 5
        %v380 = vand.u32 %v378, 31
        %v381 = vsub.s32 32, %v380
        %v382 = vshrl.u32 683565275, %v381
        %v383 = vshll.u32 683565275, %v380
        %v384 = vshrl.u32 2475754826, %v381
        %v385 = vor.u32 %v383, %v384
        %v386 = vshll.u32 2475754826, %v380
        %v387 = vshrl.u32 2131351028, %v381
        %v388 = vor.u32 %v386, %v387
        %v389 = vshll.u32 2131351028, %v380
        %v390 = vshrl.u32 2102212464, %v381
        %v391 = vor.u32 %v389, %v390
        %v392 = vshll.u32 2102212464, %v380
        %v393 = vshrl.u32 920167782, %v381
        %v394 = vor.u32 %v392, %v393
        %v395 = vshll.u32 920167782, %v380
        %v396 = vshrl.u32 1326507024, %v381
        %v397 = vor.u32 %v395, %v396
        %vm398 = vcmp.lt.s32.totalorder %v379, 1
        %vm399 = vcmp.lt.s32.totalorder %v379, 2
        %vm400 = vcmp.lt.s32.totalorder %v379, 3
        %vm401 = vcmp.lt.s32.totalorder %v379, 4
        %v402 = vsel %vm398, %v382, %v385
        %v403 = vsel %vm401, %v391, 2102212464
        %v404 = vsel %vm400, %v388, %v403
        %v405 = vsel %vm399, %v402, %v404
        %v406 = vsel %vm398, %v385, %v388
        %v407 = vsel %vm401, %v394, 920167782
        %v408 = vsel %vm400, %v391, %v407
        %v409 = vsel %vm399, %v406, %v408
        %v410 = vsel %vm398, %v388, %v391
        %v411 = vsel %vm401, %v397, 1326507024
        %v412 = vsel %vm400, %v394, %v411
        %v413 = vsel %vm399, %v410, %v412
        %v414 = vshll.u32 %v374, 8
        %v415 = vand.u32 %v414, 65535
        %v416 = vshrl.u32 %v414, 16
        %v417 = vand.u32 %v413, 65535
        %v418 = vshrl.u32 %v413, 16
        %v419 = vmul.u32 %v415, %v417
        %v420 = vmul.u32 %v415, %v418
        %v421 = vmul.u32 %v416, %v417
        %v422 = vmul.u32 %v416, %v418
        %v423 = vshll.u32 %v420, 16
        %v424 = vshrl.u32 %v420, 16
        %v425 = vshll.u32 %v421, 16
        %v426 = vshrl.u32 %v421, 16
        %vm427 = vc.u32 %v419, %v423
        %v428 = vsel %vm427, 1, 0
        %v429 = vadd.s32 %v419, %v423
        %v430 = vadd.s32 %v422, %v428
        %vm431 = vc.u32 %v429, %v425
        %v432 = vsel %vm431, 1, 0
        %v433 = vadd.s32 %v429, %v425
        %v434 = vadd.s32 %v430, %v432
        %v435 = vadd.s32 %v434, %v424
        %v436 = vadd.s32 %v435, %v426
        %v437 = vand.u32 %v414, 65535
        %v438 = vshrl.u32 %v414, 16
        %v439 = vand.u32 %v409, 65535
        %v440 = vshrl.u32 %v409, 16
        %v441 = vmul.u32 %v437, %v439
        %v442 = vmul.u32 %v437, %v440
        %v443 = vmul.u32 %v438, %v439
        %v444 = vmul.u32 %v438, %v440
        %v445 = vshll.u32 %v442, 16
        %v446 = vshrl.u32 %v442, 16
        %v447 = vshll.u32 %v443, 16
        %v448 = vshrl.u32 %v443, 16
        %vm449 = vc.u32 %v441, %v445
        %v450 = vsel %vm449, 1, 0
        %v451 = vadd.s32 %v441, %v445
        %v452 = vadd.s32 %v444, %v450
        %vm453 = vc.u32 %v451, %v447
        %v454 = vsel %vm453, 1, 0
        %v455 = vadd.s32 %v451, %v447
        %v456 = vadd.s32 %v452, %v454
        %v457 = vadd.s32 %v456, %v446
        %v458 = vadd.s32 %v457, %v448
        %v459 = vmul.u32 %v414, %v405
        %v460 = vadd.s32 %v436, %v455
        %vm461 = vc.u32 %v436, %v455
        %v462 = vadd.s32 %v458, 1
        %v463 = vsel %vm461, %v462, %v458
        %v464 = vadd.s32 %v459, %v463
        %v465 = vadd.s32 %v464, 536870912
        %v466 = vshrl.u32 %v465, 30
        %v467 = vshll.u32 %v466, 30
        %v468 = vsub.s32 %v464, %v467
        %vm469 = vcmp.lt.s32.totalorder %v468, 0
        %v470 = vsub.s32 0, %v468
        %v471 = vsel %vm469, %v470, %v468
        %v472 = vclz %v471
        %v473 = vsub.s32 %v472, 2
        %vm474 = vcmp.gt.s32.totalorder 0, %v473
        %v475 = vsel %vm474, 0, %v473
        %v476 = vsub.s32 32, %v475
        %v477 = vshll.u32 %v468, %v475
        %v478 = vshrl.u32 %v460, %v476
        %v479 = vor.u32 %v477, %v478
        %v480 = vsub.s32 4294967266, %v475
        %v481 = vadd.s32 %v480, 127
        %v482 = vshll.u32 %v481, 23
        %v483 = vor.u32 4788187, %v482
        %v484 = vand.u32 2147483647, %v483
        %v486 = vcvt.s32.f32 %v479
        %v487 = vmul.f32 %v486, %v484
        %v488 = vxor.u32 %v487, 2147483648
        %v489 = vsel %vm368, %v488, %v487
        %v490 = vsub.s32 4, %v466
        %v491 = vsel %vm368, %v490, %v466
        %v492 = vsel %vm367, %v365, %v489
        %v493 = vsel %vm367, 0, %v491
        %v494 = vmul.f32 %v492, %v492
        %v495 = vmul.f32 %v494, -0.001358992
        %v496 = vadd.f32 %v495, 0.041655596
        %v497 = vmul.f32 %v494, %v496
        %v498 = vadd.f32 %v497, -0.4999988
        %v499 = vmul.f32 %v494, %v498
        %v500 = vadd.f32 1.0, %v499
        %v501 = vmul.f32 %v492, %v492
        %v502 = vmul.f32 %v501, -0.00019511016
        %v503 = vadd.f32 %v502, 0.008332121
        %v504 = vmul.f32 %v501, %v503
        %v505 = vadd.f32 %v504, -0.16666654
        %v506 = vmul.f32 %v501, %v505
        %v507 = vadd.f32 %v506, 1.0
        %v508 = vmul.f32 %v507, %v492
        %vm509 = vweird.f32 %v365
        %v510 = vadd.s32 %v493, 3
        %v511 = vand.u32 %v510, 3
        %vm512 = vcmp.lt.s32.totalorder %v511, 2
        %vm513 = vcmp.eq.s32.totalorder %v511, 0
        %v514 = vxor.u32 %v508, 2147483648
        %v515 = vsel %vm513, %v500, %v514
        %vm516 = vcmp.eq.s32.totalorder %v511, 2
        %v517 = vxor.u32 %v500, 2147483648
        %v518 = vsel %vm516, %v517, %v508
        %v519 = vsel %vm512, %v515, %v518
        %v520 = vsel %vm509, nan, %v519
        %v521 = vld [vmem:[%s5] sm:$0x1]
        %v522 = vperm.slane %v521, 0
        %v523 = vmul.f32 %v520, %v522
        %v524 = vadd.f32 %v357, %v523
        %v525 = vand.u32 2147483647, %v365
        %vm526 = vcmp.le.f32.partialorder %v525, 0.7853982
        %vm527 = vcmp.lt.s32.totalorder %v365, 0
        %v528 = vand.u32 %v365, 2139095040
        %v529 = vshrl.u32 %v528, 23
        %v530 = vsub.s32 %v529, 127
        %v531 = vand.u32 2147483647, %v365
        %v532 = vand.u32 %v531, 8388607
        %v533 = vor.u32 %v532, 8388608
        %v534 = vsub.s32 0, %v533
        %v535 = vadd.s32 %v530, 1
        %vm536 = vcmp.gt.s32.totalorder %v535, 0
        %v537 = vsel %vm536, %v535, 0
        %v538 = vshrl.u32 %v537, 5
        %v539 = vand.u32 %v537, 31
        %v540 = vsub.s32 32, %v539
        %v541 = vshrl.u32 683565275, %v540
        %v542 = vshll.u32 683565275, %v539
        %v543 = vshrl.u32 2475754826, %v540
        %v544 = vor.u32 %v542, %v543
        %v545 = vshll.u32 2475754826, %v539
        %v546 = vshrl.u32 2131351028, %v540
        %v547 = vor.u32 %v545, %v546
        %v548 = vshll.u32 2131351028, %v539
        %v549 = vshrl.u32 2102212464, %v540
        %v550 = vor.u32 %v548, %v549
        %v551 = vshll.u32 2102212464, %v539
        %v552 = vshrl.u32 920167782, %v540
        %v553 = vor.u32 %v551, %v552
        %v554 = vshll.u32 920167782, %v539
        %v555 = vshrl.u32 1326507024, %v540
        %v556 = vor.u32 %v554, %v555
        %vm557 = vcmp.lt.s32.totalorder %v538, 1
        %vm558 = vcmp.lt.s32.totalorder %v538, 2
        %vm559 = vcmp.lt.s32.totalorder %v538, 3
        %vm560 = vcmp.lt.s32.totalorder %v538, 4
        %v561 = vsel %vm557, %v541, %v544
        %v562 = vsel %vm560, %v550, 2102212464
        %v563 = vsel %vm559, %v547, %v562
        %v564 = vsel %vm558, %v561, %v563
        %v565 = vsel %vm557, %v544, %v547
        %v566 = vsel %vm560, %v553, 920167782
        %v567 = vsel %vm559, %v550, %v566
        %v568 = vsel %vm558, %v565, %v567
        %v569 = vsel %vm557, %v547, %v550
        %v570 = vsel %vm560, %v556, 1326507024
        %v571 = vsel %vm559, %v553, %v570
        %v572 = vsel %vm558, %v569, %v571
        %v573 = vshll.u32 %v533, 8
        %v574 = vand.u32 %v573, 65535
        %v575 = vshrl.u32 %v573, 16
        %v576 = vand.u32 %v572, 65535
        %v577 = vshrl.u32 %v572, 16
        %v578 = vmul.u32 %v574, %v576
        %v579 = vmul.u32 %v574, %v577
        %v580 = vmul.u32 %v575, %v576
        %v581 = vmul.u32 %v575, %v577
        %v582 = vshll.u32 %v579, 16
        %v583 = vshrl.u32 %v579, 16
        %v584 = vshll.u32 %v580, 16
        %v585 = vshrl.u32 %v580, 16
        %vm586 = vc.u32 %v578, %v582
        %v587 = vsel %vm586, 1, 0
        %v588 = vadd.s32 %v578, %v582
        %v589 = vadd.s32 %v581, %v587
        %vm590 = vc.u32 %v588, %v584
        %v591 = vsel %vm590, 1, 0
        %v592 = vadd.s32 %v588, %v584
        %v593 = vadd.s32 %v589, %v591
        %v594 = vadd.s32 %v593, %v583
        %v595 = vadd.s32 %v594, %v585
        %v596 = vand.u32 %v573, 65535
        %v597 = vshrl.u32 %v573, 16
        %v598 = vand.u32 %v568, 65535
        %v599 = vshrl.u32 %v568, 16
        %v600 = vmul.u32 %v596, %v598
        %v601 = vmul.u32 %v596, %v599
        %v602 = vmul.u32 %v597, %v598
        %v603 = vmul.u32 %v597, %v599
        %v604 = vshll.u32 %v601, 16
        %v605 = vshrl.u32 %v601, 16
        %v606 = vshll.u32 %v602, 16
        %v607 = vshrl.u32 %v602, 16
        %vm608 = vc.u32 %v600, %v604
        %v609 = vsel %vm608, 1, 0
        %v610 = vadd.s32 %v600, %v604
        %v611 = vadd.s32 %v603, %v609
        %vm612 = vc.u32 %v610, %v606
        %v613 = vsel %vm612, 1, 0
        %v614 = vadd.s32 %v610, %v606
        %v615 = vadd.s32 %v611, %v613
        %v616 = vadd.s32 %v615, %v605
        %v617 = vadd.s32 %v616, %v607
        %v618 = vmul.u32 %v573, %v564
        %v619 = vadd.s32 %v595, %v614
        %vm620 = vc.u32 %v595, %v614
        %v621 = vadd.s32 %v617, 1
        %v622 = vsel %vm620, %v621, %v617
        %v623 = vadd.s32 %v618, %v622
        %v624 = vadd.s32 %v623, 536870912
        %v625 = vshrl.u32 %v624, 30
        %v626 = vshll.u32 %v625, 30
        %v627 = vsub.s32 %v623, %v626
        %vm628 = vcmp.lt.s32.totalorder %v627, 0
        %v629 = vsub.s32 0, %v627
        %v630 = vsel %vm628, %v629, %v627
        %v631 = vclz %v630
        %v632 = vsub.s32 %v631, 2
        %vm633 = vcmp.gt.s32.totalorder 0, %v632
        %v634 = vsel %vm633, 0, %v632
        %v635 = vsub.s32 32, %v634
        %v636 = vshll.u32 %v627, %v634
        %v637 = vshrl.u32 %v619, %v635
        %v638 = vor.u32 %v636, %v637
        %v639 = vsub.s32 4294967266, %v634
        %v640 = vadd.s32 %v639, 127
        %v641 = vshll.u32 %v640, 23
        %v642 = vor.u32 4788187, %v641
        %v643 = vand.u32 2147483647, %v642
        %v645 = vcvt.s32.f32 %v638
        %v646 = vmul.f32 %v645, %v643
        %v647 = vxor.u32 %v646, 2147483648
        %v648 = vsel %vm527, %v647, %v646
        %v649 = vsub.s32 4, %v625
        %v650 = vsel %vm527, %v649, %v625
        %v651 = vsel %vm526, %v365, %v648
        %v652 = vsel %vm526, 0, %v650
        %v653 = vmul.f32 %v651, %v651
        %v654 = vmul.f32 %v653, -0.001358992
        %v655 = vadd.f32 %v654, 0.041655596
        %v656 = vmul.f32 %v653, %v655
        %v657 = vadd.f32 %v656, -0.4999988
        %v658 = vmul.f32 %v653, %v657
        %v659 = vadd.f32 1.0, %v658
        %v660 = vmul.f32 %v651, %v651
        %v661 = vmul.f32 %v660, -0.00019511016
        %v662 = vadd.f32 %v661, 0.008332121
        %v663 = vmul.f32 %v660, %v662
        %v664 = vadd.f32 %v663, -0.16666654
        %v665 = vmul.f32 %v660, %v664
        %v666 = vadd.f32 %v665, 1.0
        %v667 = vmul.f32 %v666, %v651
        %vm668 = vweird.f32 %v365
        %v669 = vand.u32 %v652, 3
        %vm670 = vcmp.lt.s32.totalorder %v669, 2
        %vm671 = vcmp.eq.s32.totalorder %v669, 0
        %v672 = vxor.u32 %v667, 2147483648
        %v673 = vsel %vm671, %v659, %v672
        %vm674 = vcmp.eq.s32.totalorder %v669, 2
        %v675 = vxor.u32 %v659, 2147483648
        %v676 = vsel %vm674, %v675, %v667
        %v677 = vsel %vm670, %v673, %v676
        %v678 = vsel %vm668, nan, %v677
        %v679 = vld [vmem:[%s6] sm:$0x1]
        %v680 = vperm.slane %v679, 0
        %v681 = vmul.f32 %v678, %v680
        %v682 = vadd.f32 %v524, %v681
        %v683 = vld [vmem:[%s4 + $0x1] sm:$0x1]
        %v684 = vperm.slane %v683, 0
        %v685 = vmul.f32 %v362, %v684
        %v686 = vand.u32 2147483647, %v685
        %vm687 = vcmp.le.f32.partialorder %v686, 0.7853982
        %vm688 = vcmp.lt.s32.totalorder %v685, 0
        %v689 = vand.u32 %v685, 2139095040
        %v690 = vshrl.u32 %v689, 23
        %v691 = vsub.s32 %v690, 127
        %v692 = vand.u32 2147483647, %v685
        %v693 = vand.u32 %v692, 8388607
        %v694 = vor.u32 %v693, 8388608
        %v695 = vsub.s32 0, %v694
        %v696 = vadd.s32 %v691, 1
        %vm697 = vcmp.gt.s32.totalorder %v696, 0
        %v698 = vsel %vm697, %v696, 0
        %v699 = vshrl.u32 %v698, 5
        %v700 = vand.u32 %v698, 31
        %v701 = vsub.s32 32, %v700
        %v702 = vshrl.u32 683565275, %v701
        %v703 = vshll.u32 683565275, %v700
        %v704 = vshrl.u32 2475754826, %v701
        %v705 = vor.u32 %v703, %v704
        %v706 = vshll.u32 2475754826, %v700
        %v707 = vshrl.u32 2131351028, %v701
        %v708 = vor.u32 %v706, %v707
        %v709 = vshll.u32 2131351028, %v700
        %v710 = vshrl.u32 2102212464, %v701
        %v711 = vor.u32 %v709, %v710
        %v712 = vshll.u32 2102212464, %v700
        %v713 = vshrl.u32 920167782, %v701
        %v714 = vor.u32 %v712, %v713
        %v715 = vshll.u32 920167782, %v700
        %v716 = vshrl.u32 1326507024, %v701
        %v717 = vor.u32 %v715, %v716
        %vm718 = vcmp.lt.s32.totalorder %v699, 1
        %vm719 = vcmp.lt.s32.totalorder %v699, 2
        %vm720 = vcmp.lt.s32.totalorder %v699, 3
        %vm721 = vcmp.lt.s32.totalorder %v699, 4
        %v722 = vsel %vm718, %v702, %v705
        %v723 = vsel %vm721, %v711, 2102212464
        %v724 = vsel %vm720, %v708, %v723
        %v725 = vsel %vm719, %v722, %v724
        %v726 = vsel %vm718, %v705, %v708
        %v727 = vsel %vm721, %v714, 920167782
        %v728 = vsel %vm720, %v711, %v727
        %v729 = vsel %vm719, %v726, %v728
        %v730 = vsel %vm718, %v708, %v711
        %v731 = vsel %vm721, %v717, 1326507024
        %v732 = vsel %vm720, %v714, %v731
        %v733 = vsel %vm719, %v730, %v732
        %v734 = vshll.u32 %v694, 8
        %v735 = vand.u32 %v734, 65535
        %v736 = vshrl.u32 %v734, 16
        %v737 = vand.u32 %v733, 65535
        %v738 = vshrl.u32 %v733, 16
        %v739 = vmul.u32 %v735, %v737
        %v740 = vmul.u32 %v735, %v738
        %v741 = vmul.u32 %v736, %v737
        %v742 = vmul.u32 %v736, %v738
        %v743 = vshll.u32 %v740, 16
        %v744 = vshrl.u32 %v740, 16
        %v745 = vshll.u32 %v741, 16
        %v746 = vshrl.u32 %v741, 16
        %vm747 = vc.u32 %v739, %v743
        %v748 = vsel %vm747, 1, 0
        %v749 = vadd.s32 %v739, %v743
        %v750 = vadd.s32 %v742, %v748
        %vm751 = vc.u32 %v749, %v745
        %v752 = vsel %vm751, 1, 0
        %v753 = vadd.s32 %v749, %v745
        %v754 = vadd.s32 %v750, %v752
        %v755 = vadd.s32 %v754, %v744
        %v756 = vadd.s32 %v755, %v746
        %v757 = vand.u32 %v734, 65535
        %v758 = vshrl.u32 %v734, 16
        %v759 = vand.u32 %v729, 65535
        %v760 = vshrl.u32 %v729, 16
        %v761 = vmul.u32 %v757, %v759
        %v762 = vmul.u32 %v757, %v760
        %v763 = vmul.u32 %v758, %v759
        %v764 = vmul.u32 %v758, %v760
        %v765 = vshll.u32 %v762, 16
        %v766 = vshrl.u32 %v762, 16
        %v767 = vshll.u32 %v763, 16
        %v768 = vshrl.u32 %v763, 16
        %vm769 = vc.u32 %v761, %v765
        %v770 = vsel %vm769, 1, 0
        %v771 = vadd.s32 %v761, %v765
        %v772 = vadd.s32 %v764, %v770
        %vm773 = vc.u32 %v771, %v767
        %v774 = vsel %vm773, 1, 0
        %v775 = vadd.s32 %v771, %v767
        %v776 = vadd.s32 %v772, %v774
        %v777 = vadd.s32 %v776, %v766
        %v778 = vadd.s32 %v777, %v768
        %v779 = vmul.u32 %v734, %v725
        %v780 = vadd.s32 %v756, %v775
        %vm781 = vc.u32 %v756, %v775
        %v782 = vadd.s32 %v778, 1
        %v783 = vsel %vm781, %v782, %v778
        %v784 = vadd.s32 %v779, %v783
        %v785 = vadd.s32 %v784, 536870912
        %v786 = vshrl.u32 %v785, 30
        %v787 = vshll.u32 %v786, 30
        %v788 = vsub.s32 %v784, %v787
        %vm789 = vcmp.lt.s32.totalorder %v788, 0
        %v790 = vsub.s32 0, %v788
        %v791 = vsel %vm789, %v790, %v788
        %v792 = vclz %v791
        %v793 = vsub.s32 %v792, 2
        %vm794 = vcmp.gt.s32.totalorder 0, %v793
        %v795 = vsel %vm794, 0, %v793
        %v796 = vsub.s32 32, %v795
        %v797 = vshll.u32 %v788, %v795
        %v798 = vshrl.u32 %v780, %v796
        %v799 = vor.u32 %v797, %v798
        %v800 = vsub.s32 4294967266, %v795
        %v801 = vadd.s32 %v800, 127
        %v802 = vshll.u32 %v801, 23
        %v803 = vor.u32 4788187, %v802
        %v804 = vand.u32 2147483647, %v803
        %v806 = vcvt.s32.f32 %v799
        %v807 = vmul.f32 %v806, %v804
        %v808 = vxor.u32 %v807, 2147483648
        %v809 = vsel %vm688, %v808, %v807
        %v810 = vsub.s32 4, %v786
        %v811 = vsel %vm688, %v810, %v786
        %v812 = vsel %vm687, %v685, %v809
        %v813 = vsel %vm687, 0, %v811
        %v814 = vmul.f32 %v812, %v812
        %v815 = vmul.f32 %v814, -0.001358992
        %v816 = vadd.f32 %v815, 0.041655596
        %v817 = vmul.f32 %v814, %v816
        %v818 = vadd.f32 %v817, -0.4999988
        %v819 = vmul.f32 %v814, %v818
        %v820 = vadd.f32 1.0, %v819
        %v821 = vmul.f32 %v812, %v812
        %v822 = vmul.f32 %v821, -0.00019511016
        %v823 = vadd.f32 %v822, 0.008332121
        %v824 = vmul.f32 %v821, %v823
        %v825 = vadd.f32 %v824, -0.16666654
        %v826 = vmul.f32 %v821, %v825
        %v827 = vadd.f32 %v826, 1.0
        %v828 = vmul.f32 %v827, %v812
        %vm829 = vweird.f32 %v685
        %v830 = vadd.s32 %v813, 3
        %v831 = vand.u32 %v830, 3
        %vm832 = vcmp.lt.s32.totalorder %v831, 2
        %vm833 = vcmp.eq.s32.totalorder %v831, 0
        %v834 = vxor.u32 %v828, 2147483648
        %v835 = vsel %vm833, %v820, %v834
        %vm836 = vcmp.eq.s32.totalorder %v831, 2
        %v837 = vxor.u32 %v820, 2147483648
        %v838 = vsel %vm836, %v837, %v828
        %v839 = vsel %vm832, %v835, %v838
        %v840 = vsel %vm829, nan, %v839
        %v841 = vld [vmem:[%s5 + $0x1] sm:$0x1]
        %v842 = vperm.slane %v841, 0
        %v843 = vmul.f32 %v840, %v842
        %v844 = vadd.f32 %v682, %v843
        %v845 = vand.u32 2147483647, %v685
        %vm846 = vcmp.le.f32.partialorder %v845, 0.7853982
        %vm847 = vcmp.lt.s32.totalorder %v685, 0
        %v848 = vand.u32 %v685, 2139095040
        %v849 = vshrl.u32 %v848, 23
        %v850 = vsub.s32 %v849, 127
        %v851 = vand.u32 2147483647, %v685
        %v852 = vand.u32 %v851, 8388607
        %v853 = vor.u32 %v852, 8388608
        %v854 = vsub.s32 0, %v853
        %v855 = vadd.s32 %v850, 1
        %vm856 = vcmp.gt.s32.totalorder %v855, 0
        %v857 = vsel %vm856, %v855, 0
        %v858 = vshrl.u32 %v857, 5
        %v859 = vand.u32 %v857, 31
        %v860 = vsub.s32 32, %v859
        %v861 = vshrl.u32 683565275, %v860
        %v862 = vshll.u32 683565275, %v859
        %v863 = vshrl.u32 2475754826, %v860
        %v864 = vor.u32 %v862, %v863
        %v865 = vshll.u32 2475754826, %v859
        %v866 = vshrl.u32 2131351028, %v860
        %v867 = vor.u32 %v865, %v866
        %v868 = vshll.u32 2131351028, %v859
        %v869 = vshrl.u32 2102212464, %v860
        %v870 = vor.u32 %v868, %v869
        %v871 = vshll.u32 2102212464, %v859
        %v872 = vshrl.u32 920167782, %v860
        %v873 = vor.u32 %v871, %v872
        %v874 = vshll.u32 920167782, %v859
        %v875 = vshrl.u32 1326507024, %v860
        %v876 = vor.u32 %v874, %v875
        %vm877 = vcmp.lt.s32.totalorder %v858, 1
        %vm878 = vcmp.lt.s32.totalorder %v858, 2
        %vm879 = vcmp.lt.s32.totalorder %v858, 3
        %vm880 = vcmp.lt.s32.totalorder %v858, 4
        %v881 = vsel %vm877, %v861, %v864
        %v882 = vsel %vm880, %v870, 2102212464
        %v883 = vsel %vm879, %v867, %v882
        %v884 = vsel %vm878, %v881, %v883
        %v885 = vsel %vm877, %v864, %v867
        %v886 = vsel %vm880, %v873, 920167782
        %v887 = vsel %vm879, %v870, %v886
        %v888 = vsel %vm878, %v885, %v887
        %v889 = vsel %vm877, %v867, %v870
        %v890 = vsel %vm880, %v876, 1326507024
        %v891 = vsel %vm879, %v873, %v890
        %v892 = vsel %vm878, %v889, %v891
        %v893 = vshll.u32 %v853, 8
        %v894 = vand.u32 %v893, 65535
        %v895 = vshrl.u32 %v893, 16
        %v896 = vand.u32 %v892, 65535
        %v897 = vshrl.u32 %v892, 16
        %v898 = vmul.u32 %v894, %v896
        %v899 = vmul.u32 %v894, %v897
        %v900 = vmul.u32 %v895, %v896
        %v901 = vmul.u32 %v895, %v897
        %v902 = vshll.u32 %v899, 16
        %v903 = vshrl.u32 %v899, 16
        %v904 = vshll.u32 %v900, 16
        %v905 = vshrl.u32 %v900, 16
        %vm906 = vc.u32 %v898, %v902
        %v907 = vsel %vm906, 1, 0
        %v908 = vadd.s32 %v898, %v902
        %v909 = vadd.s32 %v901, %v907
        %vm910 = vc.u32 %v908, %v904
        %v911 = vsel %vm910, 1, 0
        %v912 = vadd.s32 %v908, %v904
        %v913 = vadd.s32 %v909, %v911
        %v914 = vadd.s32 %v913, %v903
        %v915 = vadd.s32 %v914, %v905
        %v916 = vand.u32 %v893, 65535
        %v917 = vshrl.u32 %v893, 16
        %v918 = vand.u32 %v888, 65535
        %v919 = vshrl.u32 %v888, 16
        %v920 = vmul.u32 %v916, %v918
        %v921 = vmul.u32 %v916, %v919
        %v922 = vmul.u32 %v917, %v918
        %v923 = vmul.u32 %v917, %v919
        %v924 = vshll.u32 %v921, 16
        %v925 = vshrl.u32 %v921, 16
        %v926 = vshll.u32 %v922, 16
        %v927 = vshrl.u32 %v922, 16
        %vm928 = vc.u32 %v920, %v924
        %v929 = vsel %vm928, 1, 0
        %v930 = vadd.s32 %v920, %v924
        %v931 = vadd.s32 %v923, %v929
        %vm932 = vc.u32 %v930, %v926
        %v933 = vsel %vm932, 1, 0
        %v934 = vadd.s32 %v930, %v926
        %v935 = vadd.s32 %v931, %v933
        %v936 = vadd.s32 %v935, %v925
        %v937 = vadd.s32 %v936, %v927
        %v938 = vmul.u32 %v893, %v884
        %v939 = vadd.s32 %v915, %v934
        %vm940 = vc.u32 %v915, %v934
        %v941 = vadd.s32 %v937, 1
        %v942 = vsel %vm940, %v941, %v937
        %v943 = vadd.s32 %v938, %v942
        %v944 = vadd.s32 %v943, 536870912
        %v945 = vshrl.u32 %v944, 30
        %v946 = vshll.u32 %v945, 30
        %v947 = vsub.s32 %v943, %v946
        %vm948 = vcmp.lt.s32.totalorder %v947, 0
        %v949 = vsub.s32 0, %v947
        %v950 = vsel %vm948, %v949, %v947
        %v951 = vclz %v950
        %v952 = vsub.s32 %v951, 2
        %vm953 = vcmp.gt.s32.totalorder 0, %v952
        %v954 = vsel %vm953, 0, %v952
        %v955 = vsub.s32 32, %v954
        %v956 = vshll.u32 %v947, %v954
        %v957 = vshrl.u32 %v939, %v955
        %v958 = vor.u32 %v956, %v957
        %v959 = vsub.s32 4294967266, %v954
        %v960 = vadd.s32 %v959, 127
        %v961 = vshll.u32 %v960, 23
        %v962 = vor.u32 4788187, %v961
        %v963 = vand.u32 2147483647, %v962
        %v965 = vcvt.s32.f32 %v958
        %v966 = vmul.f32 %v965, %v963
        %v967 = vxor.u32 %v966, 2147483648
        %v968 = vsel %vm847, %v967, %v966
        %v969 = vsub.s32 4, %v945
        %v970 = vsel %vm847, %v969, %v945
        %v971 = vsel %vm846, %v685, %v968
        %v972 = vsel %vm846, 0, %v970
        %v973 = vmul.f32 %v971, %v971
        %v974 = vmul.f32 %v973, -0.001358992
        %v975 = vadd.f32 %v974, 0.041655596
        %v976 = vmul.f32 %v973, %v975
        %v977 = vadd.f32 %v976, -0.4999988
        %v978 = vmul.f32 %v973, %v977
        %v979 = vadd.f32 1.0, %v978
        %v980 = vmul.f32 %v971, %v971
        %v981 = vmul.f32 %v980, -0.00019511016
        %v982 = vadd.f32 %v981, 0.008332121
        %v983 = vmul.f32 %v980, %v982
        %v984 = vadd.f32 %v983, -0.16666654
        %v985 = vmul.f32 %v980, %v984
        %v986 = vadd.f32 %v985, 1.0
        %v987 = vmul.f32 %v986, %v971
        %vm988 = vweird.f32 %v685
        %v989 = vand.u32 %v972, 3
        %vm990 = vcmp.lt.s32.totalorder %v989, 2
        %vm991 = vcmp.eq.s32.totalorder %v989, 0
        %v992 = vxor.u32 %v987, 2147483648
        %v993 = vsel %vm991, %v979, %v992
        %vm994 = vcmp.eq.s32.totalorder %v989, 2
        %v995 = vxor.u32 %v979, 2147483648
        %v996 = vsel %vm994, %v995, %v987
        %v997 = vsel %vm990, %v993, %v996
        %v998 = vsel %vm988, nan, %v997
        %v999 = vld [vmem:[%s6 + $0x1] sm:$0x1]
        %v1000 = vperm.slane %v999, 0
        %v1001 = vmul.f32 %v998, %v1000
        %v1002 = vadd.f32 %v844, %v1001
        %v1003 = vld [vmem:[%s4 + $0x2] sm:$0x1]
        %v1004 = vperm.slane %v1003, 0
        %v1005 = vmul.f32 %v362, %v1004
        %v1006 = vand.u32 2147483647, %v1005
        %vm1007 = vcmp.le.f32.partialorder %v1006, 0.7853982
        %vm1008 = vcmp.lt.s32.totalorder %v1005, 0
        %v1009 = vand.u32 %v1005, 2139095040
        %v1010 = vshrl.u32 %v1009, 23
        %v1011 = vsub.s32 %v1010, 127
        %v1012 = vand.u32 2147483647, %v1005
        %v1013 = vand.u32 %v1012, 8388607
        %v1014 = vor.u32 %v1013, 8388608
        %v1015 = vsub.s32 0, %v1014
        %v1016 = vadd.s32 %v1011, 1
        %vm1017 = vcmp.gt.s32.totalorder %v1016, 0
        %v1018 = vsel %vm1017, %v1016, 0
        %v1019 = vshrl.u32 %v1018, 5
        %v1020 = vand.u32 %v1018, 31
        %v1021 = vsub.s32 32, %v1020
        %v1022 = vshrl.u32 683565275, %v1021
        %v1023 = vshll.u32 683565275, %v1020
        %v1024 = vshrl.u32 2475754826, %v1021
        %v1025 = vor.u32 %v1023, %v1024
        %v1026 = vshll.u32 2475754826, %v1020
        %v1027 = vshrl.u32 2131351028, %v1021
        %v1028 = vor.u32 %v1026, %v1027
        %v1029 = vshll.u32 2131351028, %v1020
        %v1030 = vshrl.u32 2102212464, %v1021
        %v1031 = vor.u32 %v1029, %v1030
        %v1032 = vshll.u32 2102212464, %v1020
        %v1033 = vshrl.u32 920167782, %v1021
        %v1034 = vor.u32 %v1032, %v1033
        %v1035 = vshll.u32 920167782, %v1020
        %v1036 = vshrl.u32 1326507024, %v1021
        %v1037 = vor.u32 %v1035, %v1036
        %vm1038 = vcmp.lt.s32.totalorder %v1019, 1
        %vm1039 = vcmp.lt.s32.totalorder %v1019, 2
        %vm1040 = vcmp.lt.s32.totalorder %v1019, 3
        %vm1041 = vcmp.lt.s32.totalorder %v1019, 4
        %v1042 = vsel %vm1038, %v1022, %v1025
        %v1043 = vsel %vm1041, %v1031, 2102212464
        %v1044 = vsel %vm1040, %v1028, %v1043
        %v1045 = vsel %vm1039, %v1042, %v1044
        %v1046 = vsel %vm1038, %v1025, %v1028
        %v1047 = vsel %vm1041, %v1034, 920167782
        %v1048 = vsel %vm1040, %v1031, %v1047
        %v1049 = vsel %vm1039, %v1046, %v1048
        %v1050 = vsel %vm1038, %v1028, %v1031
        %v1051 = vsel %vm1041, %v1037, 1326507024
        %v1052 = vsel %vm1040, %v1034, %v1051
        %v1053 = vsel %vm1039, %v1050, %v1052
        %v1054 = vshll.u32 %v1014, 8
        %v1055 = vand.u32 %v1054, 65535
        %v1056 = vshrl.u32 %v1054, 16
        %v1057 = vand.u32 %v1053, 65535
        %v1058 = vshrl.u32 %v1053, 16
        %v1059 = vmul.u32 %v1055, %v1057
        %v1060 = vmul.u32 %v1055, %v1058
        %v1061 = vmul.u32 %v1056, %v1057
        %v1062 = vmul.u32 %v1056, %v1058
        %v1063 = vshll.u32 %v1060, 16
        %v1064 = vshrl.u32 %v1060, 16
        %v1065 = vshll.u32 %v1061, 16
        %v1066 = vshrl.u32 %v1061, 16
        %vm1067 = vc.u32 %v1059, %v1063
        %v1068 = vsel %vm1067, 1, 0
        %v1069 = vadd.s32 %v1059, %v1063
        %v1070 = vadd.s32 %v1062, %v1068
        %vm1071 = vc.u32 %v1069, %v1065
        %v1072 = vsel %vm1071, 1, 0
        %v1073 = vadd.s32 %v1069, %v1065
        %v1074 = vadd.s32 %v1070, %v1072
        %v1075 = vadd.s32 %v1074, %v1064
        %v1076 = vadd.s32 %v1075, %v1066
        %v1077 = vand.u32 %v1054, 65535
        %v1078 = vshrl.u32 %v1054, 16
        %v1079 = vand.u32 %v1049, 65535
        %v1080 = vshrl.u32 %v1049, 16
        %v1081 = vmul.u32 %v1077, %v1079
        %v1082 = vmul.u32 %v1077, %v1080
        %v1083 = vmul.u32 %v1078, %v1079
        %v1084 = vmul.u32 %v1078, %v1080
        %v1085 = vshll.u32 %v1082, 16
        %v1086 = vshrl.u32 %v1082, 16
        %v1087 = vshll.u32 %v1083, 16
        %v1088 = vshrl.u32 %v1083, 16
        %vm1089 = vc.u32 %v1081, %v1085
        %v1090 = vsel %vm1089, 1, 0
        %v1091 = vadd.s32 %v1081, %v1085
        %v1092 = vadd.s32 %v1084, %v1090
        %vm1093 = vc.u32 %v1091, %v1087
        %v1094 = vsel %vm1093, 1, 0
        %v1095 = vadd.s32 %v1091, %v1087
        %v1096 = vadd.s32 %v1092, %v1094
        %v1097 = vadd.s32 %v1096, %v1086
        %v1098 = vadd.s32 %v1097, %v1088
        %v1099 = vmul.u32 %v1054, %v1045
        %v1100 = vadd.s32 %v1076, %v1095
        %vm1101 = vc.u32 %v1076, %v1095
        %v1102 = vadd.s32 %v1098, 1
        %v1103 = vsel %vm1101, %v1102, %v1098
        %v1104 = vadd.s32 %v1099, %v1103
        %v1105 = vadd.s32 %v1104, 536870912
        %v1106 = vshrl.u32 %v1105, 30
        %v1107 = vshll.u32 %v1106, 30
        %v1108 = vsub.s32 %v1104, %v1107
        %vm1109 = vcmp.lt.s32.totalorder %v1108, 0
        %v1110 = vsub.s32 0, %v1108
        %v1111 = vsel %vm1109, %v1110, %v1108
        %v1112 = vclz %v1111
        %v1113 = vsub.s32 %v1112, 2
        %vm1114 = vcmp.gt.s32.totalorder 0, %v1113
        %v1115 = vsel %vm1114, 0, %v1113
        %v1116 = vsub.s32 32, %v1115
        %v1117 = vshll.u32 %v1108, %v1115
        %v1118 = vshrl.u32 %v1100, %v1116
        %v1119 = vor.u32 %v1117, %v1118
        %v1120 = vsub.s32 4294967266, %v1115
        %v1121 = vadd.s32 %v1120, 127
        %v1122 = vshll.u32 %v1121, 23
        %v1123 = vor.u32 4788187, %v1122
        %v1124 = vand.u32 2147483647, %v1123
        %v1126 = vcvt.s32.f32 %v1119
        %v1127 = vmul.f32 %v1126, %v1124
        %v1128 = vxor.u32 %v1127, 2147483648
        %v1129 = vsel %vm1008, %v1128, %v1127
        %v1130 = vsub.s32 4, %v1106
        %v1131 = vsel %vm1008, %v1130, %v1106
        %v1132 = vsel %vm1007, %v1005, %v1129
        %v1133 = vsel %vm1007, 0, %v1131
        %v1134 = vmul.f32 %v1132, %v1132
        %v1135 = vmul.f32 %v1134, -0.001358992
        %v1136 = vadd.f32 %v1135, 0.041655596
        %v1137 = vmul.f32 %v1134, %v1136
        %v1138 = vadd.f32 %v1137, -0.4999988
        %v1139 = vmul.f32 %v1134, %v1138
        %v1140 = vadd.f32 1.0, %v1139
        %v1141 = vmul.f32 %v1132, %v1132
        %v1142 = vmul.f32 %v1141, -0.00019511016
        %v1143 = vadd.f32 %v1142, 0.008332121
        %v1144 = vmul.f32 %v1141, %v1143
        %v1145 = vadd.f32 %v1144, -0.16666654
        %v1146 = vmul.f32 %v1141, %v1145
        %v1147 = vadd.f32 %v1146, 1.0
        %v1148 = vmul.f32 %v1147, %v1132
        %vm1149 = vweird.f32 %v1005
        %v1150 = vadd.s32 %v1133, 3
        %v1151 = vand.u32 %v1150, 3
        %vm1152 = vcmp.lt.s32.totalorder %v1151, 2
        %vm1153 = vcmp.eq.s32.totalorder %v1151, 0
        %v1154 = vxor.u32 %v1148, 2147483648
        %v1155 = vsel %vm1153, %v1140, %v1154
        %vm1156 = vcmp.eq.s32.totalorder %v1151, 2
        %v1157 = vxor.u32 %v1140, 2147483648
        %v1158 = vsel %vm1156, %v1157, %v1148
        %v1159 = vsel %vm1152, %v1155, %v1158
        %v1160 = vsel %vm1149, nan, %v1159
        %v1161 = vld [vmem:[%s5 + $0x2] sm:$0x1]
        %v1162 = vperm.slane %v1161, 0
        %v1163 = vmul.f32 %v1160, %v1162
        %v1164 = vadd.f32 %v1002, %v1163
        %v1165 = vand.u32 2147483647, %v1005
        %vm1166 = vcmp.le.f32.partialorder %v1165, 0.7853982
        %vm1167 = vcmp.lt.s32.totalorder %v1005, 0
        %v1168 = vand.u32 %v1005, 2139095040
        %v1169 = vshrl.u32 %v1168, 23
        %v1170 = vsub.s32 %v1169, 127
        %v1171 = vand.u32 2147483647, %v1005
        %v1172 = vand.u32 %v1171, 8388607
        %v1173 = vor.u32 %v1172, 8388608
        %v1174 = vsub.s32 0, %v1173
        %v1175 = vadd.s32 %v1170, 1
        %vm1176 = vcmp.gt.s32.totalorder %v1175, 0
        %v1177 = vsel %vm1176, %v1175, 0
        %v1178 = vshrl.u32 %v1177, 5
        %v1179 = vand.u32 %v1177, 31
        %v1180 = vsub.s32 32, %v1179
        %v1181 = vshrl.u32 683565275, %v1180
        %v1182 = vshll.u32 683565275, %v1179
        %v1183 = vshrl.u32 2475754826, %v1180
        %v1184 = vor.u32 %v1182, %v1183
        %v1185 = vshll.u32 2475754826, %v1179
        %v1186 = vshrl.u32 2131351028, %v1180
        %v1187 = vor.u32 %v1185, %v1186
        %v1188 = vshll.u32 2131351028, %v1179
        %v1189 = vshrl.u32 2102212464, %v1180
        %v1190 = vor.u32 %v1188, %v1189
        %v1191 = vshll.u32 2102212464, %v1179
        %v1192 = vshrl.u32 920167782, %v1180
        %v1193 = vor.u32 %v1191, %v1192
        %v1194 = vshll.u32 920167782, %v1179
        %v1195 = vshrl.u32 1326507024, %v1180
        %v1196 = vor.u32 %v1194, %v1195
        %vm1197 = vcmp.lt.s32.totalorder %v1178, 1
        %vm1198 = vcmp.lt.s32.totalorder %v1178, 2
        %vm1199 = vcmp.lt.s32.totalorder %v1178, 3
        %vm1200 = vcmp.lt.s32.totalorder %v1178, 4
        %v1201 = vsel %vm1197, %v1181, %v1184
        %v1202 = vsel %vm1200, %v1190, 2102212464
        %v1203 = vsel %vm1199, %v1187, %v1202
        %v1204 = vsel %vm1198, %v1201, %v1203
        %v1205 = vsel %vm1197, %v1184, %v1187
        %v1206 = vsel %vm1200, %v1193, 920167782
        %v1207 = vsel %vm1199, %v1190, %v1206
        %v1208 = vsel %vm1198, %v1205, %v1207
        %v1209 = vsel %vm1197, %v1187, %v1190
        %v1210 = vsel %vm1200, %v1196, 1326507024
        %v1211 = vsel %vm1199, %v1193, %v1210
        %v1212 = vsel %vm1198, %v1209, %v1211
        %v1213 = vshll.u32 %v1173, 8
        %v1214 = vand.u32 %v1213, 65535
        %v1215 = vshrl.u32 %v1213, 16
        %v1216 = vand.u32 %v1212, 65535
        %v1217 = vshrl.u32 %v1212, 16
        %v1218 = vmul.u32 %v1214, %v1216
        %v1219 = vmul.u32 %v1214, %v1217
        %v1220 = vmul.u32 %v1215, %v1216
        %v1221 = vmul.u32 %v1215, %v1217
        %v1222 = vshll.u32 %v1219, 16
        %v1223 = vshrl.u32 %v1219, 16
        %v1224 = vshll.u32 %v1220, 16
        %v1225 = vshrl.u32 %v1220, 16
        %vm1226 = vc.u32 %v1218, %v1222
        %v1227 = vsel %vm1226, 1, 0
        %v1228 = vadd.s32 %v1218, %v1222
        %v1229 = vadd.s32 %v1221, %v1227
        %vm1230 = vc.u32 %v1228, %v1224
        %v1231 = vsel %vm1230, 1, 0
        %v1232 = vadd.s32 %v1228, %v1224
        %v1233 = vadd.s32 %v1229, %v1231
        %v1234 = vadd.s32 %v1233, %v1223
        %v1235 = vadd.s32 %v1234, %v1225
        %v1236 = vand.u32 %v1213, 65535
        %v1237 = vshrl.u32 %v1213, 16
        %v1238 = vand.u32 %v1208, 65535
        %v1239 = vshrl.u32 %v1208, 16
        %v1240 = vmul.u32 %v1236, %v1238
        %v1241 = vmul.u32 %v1236, %v1239
        %v1242 = vmul.u32 %v1237, %v1238
        %v1243 = vmul.u32 %v1237, %v1239
        %v1244 = vshll.u32 %v1241, 16
        %v1245 = vshrl.u32 %v1241, 16
        %v1246 = vshll.u32 %v1242, 16
        %v1247 = vshrl.u32 %v1242, 16
        %vm1248 = vc.u32 %v1240, %v1244
        %v1249 = vsel %vm1248, 1, 0
        %v1250 = vadd.s32 %v1240, %v1244
        %v1251 = vadd.s32 %v1243, %v1249
        %vm1252 = vc.u32 %v1250, %v1246
        %v1253 = vsel %vm1252, 1, 0
        %v1254 = vadd.s32 %v1250, %v1246
        %v1255 = vadd.s32 %v1251, %v1253
        %v1256 = vadd.s32 %v1255, %v1245
        %v1257 = vadd.s32 %v1256, %v1247
        %v1258 = vmul.u32 %v1213, %v1204
        %v1259 = vadd.s32 %v1235, %v1254
        %vm1260 = vc.u32 %v1235, %v1254
        %v1261 = vadd.s32 %v1257, 1
        %v1262 = vsel %vm1260, %v1261, %v1257
        %v1263 = vadd.s32 %v1258, %v1262
        %v1264 = vadd.s32 %v1263, 536870912
        %v1265 = vshrl.u32 %v1264, 30
        %v1266 = vshll.u32 %v1265, 30
        %v1267 = vsub.s32 %v1263, %v1266
        %vm1268 = vcmp.lt.s32.totalorder %v1267, 0
        %v1269 = vsub.s32 0, %v1267
        %v1270 = vsel %vm1268, %v1269, %v1267
        %v1271 = vclz %v1270
        %v1272 = vsub.s32 %v1271, 2
        %vm1273 = vcmp.gt.s32.totalorder 0, %v1272
        %v1274 = vsel %vm1273, 0, %v1272
        %v1275 = vsub.s32 32, %v1274
        %v1276 = vshll.u32 %v1267, %v1274
        %v1277 = vshrl.u32 %v1259, %v1275
        %v1278 = vor.u32 %v1276, %v1277
        %v1279 = vsub.s32 4294967266, %v1274
        %v1280 = vadd.s32 %v1279, 127
        %v1281 = vshll.u32 %v1280, 23
        %v1282 = vor.u32 4788187, %v1281
        %v1283 = vand.u32 2147483647, %v1282
        %v1285 = vcvt.s32.f32 %v1278
        %v1286 = vmul.f32 %v1285, %v1283
        %v1287 = vxor.u32 %v1286, 2147483648
        %v1288 = vsel %vm1167, %v1287, %v1286
        %v1289 = vsub.s32 4, %v1265
        %v1290 = vsel %vm1167, %v1289, %v1265
        %v1291 = vsel %vm1166, %v1005, %v1288
        %v1292 = vsel %vm1166, 0, %v1290
        %v1293 = vmul.f32 %v1291, %v1291
        %v1294 = vmul.f32 %v1293, -0.001358992
        %v1295 = vadd.f32 %v1294, 0.041655596
        %v1296 = vmul.f32 %v1293, %v1295
        %v1297 = vadd.f32 %v1296, -0.4999988
        %v1298 = vmul.f32 %v1293, %v1297
        %v1299 = vadd.f32 1.0, %v1298
        %v1300 = vmul.f32 %v1291, %v1291
        %v1301 = vmul.f32 %v1300, -0.00019511016
        %v1302 = vadd.f32 %v1301, 0.008332121
        %v1303 = vmul.f32 %v1300, %v1302
        %v1304 = vadd.f32 %v1303, -0.16666654
        %v1305 = vmul.f32 %v1300, %v1304
        %v1306 = vadd.f32 %v1305, 1.0
        %v1307 = vmul.f32 %v1306, %v1291
        %vm1308 = vweird.f32 %v1005
        %v1309 = vand.u32 %v1292, 3
        %vm1310 = vcmp.lt.s32.totalorder %v1309, 2
        %vm1311 = vcmp.eq.s32.totalorder %v1309, 0
        %v1312 = vxor.u32 %v1307, 2147483648
        %v1313 = vsel %vm1311, %v1299, %v1312
        %vm1314 = vcmp.eq.s32.totalorder %v1309, 2
        %v1315 = vxor.u32 %v1299, 2147483648
        %v1316 = vsel %vm1314, %v1315, %v1307
        %v1317 = vsel %vm1310, %v1313, %v1316
        %v1318 = vsel %vm1308, nan, %v1317
        %v1319 = vld [vmem:[%s6 + $0x2] sm:$0x1]
        %v1320 = vperm.slane %v1319, 0
        %v1321 = vmul.f32 %v1318, %v1320
        %v1322 = vadd.f32 %v1164, %v1321
        %v1323 = vld [vmem:[%s4 + $0x3] sm:$0x1]
        %v1324 = vperm.slane %v1323, 0
        %v1325 = vmul.f32 %v362, %v1324
        %v1326 = vand.u32 2147483647, %v1325
        %vm1327 = vcmp.le.f32.partialorder %v1326, 0.7853982
        %vm1328 = vcmp.lt.s32.totalorder %v1325, 0
        %v1329 = vand.u32 %v1325, 2139095040
        %v1330 = vshrl.u32 %v1329, 23
        %v1331 = vsub.s32 %v1330, 127
        %v1332 = vand.u32 2147483647, %v1325
        %v1333 = vand.u32 %v1332, 8388607
        %v1334 = vor.u32 %v1333, 8388608
        %v1335 = vsub.s32 0, %v1334
        %v1336 = vadd.s32 %v1331, 1
        %vm1337 = vcmp.gt.s32.totalorder %v1336, 0
        %v1338 = vsel %vm1337, %v1336, 0
        %v1339 = vshrl.u32 %v1338, 5
        %v1340 = vand.u32 %v1338, 31
        %v1341 = vsub.s32 32, %v1340
        %v1342 = vshrl.u32 683565275, %v1341
        %v1343 = vshll.u32 683565275, %v1340
        %v1344 = vshrl.u32 2475754826, %v1341
        %v1345 = vor.u32 %v1343, %v1344
        %v1346 = vshll.u32 2475754826, %v1340
        %v1347 = vshrl.u32 2131351028, %v1341
        %v1348 = vor.u32 %v1346, %v1347
        %v1349 = vshll.u32 2131351028, %v1340
        %v1350 = vshrl.u32 2102212464, %v1341
        %v1351 = vor.u32 %v1349, %v1350
        %v1352 = vshll.u32 2102212464, %v1340
        %v1353 = vshrl.u32 920167782, %v1341
        %v1354 = vor.u32 %v1352, %v1353
        %v1355 = vshll.u32 920167782, %v1340
        %v1356 = vshrl.u32 1326507024, %v1341
        %v1357 = vor.u32 %v1355, %v1356
        %vm1358 = vcmp.lt.s32.totalorder %v1339, 1
        %vm1359 = vcmp.lt.s32.totalorder %v1339, 2
        %vm1360 = vcmp.lt.s32.totalorder %v1339, 3
        %vm1361 = vcmp.lt.s32.totalorder %v1339, 4
        %v1362 = vsel %vm1358, %v1342, %v1345
        %v1363 = vsel %vm1361, %v1351, 2102212464
        %v1364 = vsel %vm1360, %v1348, %v1363
        %v1365 = vsel %vm1359, %v1362, %v1364
        %v1366 = vsel %vm1358, %v1345, %v1348
        %v1367 = vsel %vm1361, %v1354, 920167782
        %v1368 = vsel %vm1360, %v1351, %v1367
        %v1369 = vsel %vm1359, %v1366, %v1368
        %v1370 = vsel %vm1358, %v1348, %v1351
        %v1371 = vsel %vm1361, %v1357, 1326507024
        %v1372 = vsel %vm1360, %v1354, %v1371
        %v1373 = vsel %vm1359, %v1370, %v1372
        %v1374 = vshll.u32 %v1334, 8
        %v1375 = vand.u32 %v1374, 65535
        %v1376 = vshrl.u32 %v1374, 16
        %v1377 = vand.u32 %v1373, 65535
        %v1378 = vshrl.u32 %v1373, 16
        %v1379 = vmul.u32 %v1375, %v1377
        %v1380 = vmul.u32 %v1375, %v1378
        %v1381 = vmul.u32 %v1376, %v1377
        %v1382 = vmul.u32 %v1376, %v1378
        %v1383 = vshll.u32 %v1380, 16
        %v1384 = vshrl.u32 %v1380, 16
        %v1385 = vshll.u32 %v1381, 16
        %v1386 = vshrl.u32 %v1381, 16
        %vm1387 = vc.u32 %v1379, %v1383
        %v1388 = vsel %vm1387, 1, 0
        %v1389 = vadd.s32 %v1379, %v1383
        %v1390 = vadd.s32 %v1382, %v1388
        %vm1391 = vc.u32 %v1389, %v1385
        %v1392 = vsel %vm1391, 1, 0
        %v1393 = vadd.s32 %v1389, %v1385
        %v1394 = vadd.s32 %v1390, %v1392
        %v1395 = vadd.s32 %v1394, %v1384
        %v1396 = vadd.s32 %v1395, %v1386
        %v1397 = vand.u32 %v1374, 65535
        %v1398 = vshrl.u32 %v1374, 16
        %v1399 = vand.u32 %v1369, 65535
        %v1400 = vshrl.u32 %v1369, 16
        %v1401 = vmul.u32 %v1397, %v1399
        %v1402 = vmul.u32 %v1397, %v1400
        %v1403 = vmul.u32 %v1398, %v1399
        %v1404 = vmul.u32 %v1398, %v1400
        %v1405 = vshll.u32 %v1402, 16
        %v1406 = vshrl.u32 %v1402, 16
        %v1407 = vshll.u32 %v1403, 16
        %v1408 = vshrl.u32 %v1403, 16
        %vm1409 = vc.u32 %v1401, %v1405
        %v1410 = vsel %vm1409, 1, 0
        %v1411 = vadd.s32 %v1401, %v1405
        %v1412 = vadd.s32 %v1404, %v1410
        %vm1413 = vc.u32 %v1411, %v1407
        %v1414 = vsel %vm1413, 1, 0
        %v1415 = vadd.s32 %v1411, %v1407
        %v1416 = vadd.s32 %v1412, %v1414
        %v1417 = vadd.s32 %v1416, %v1406
        %v1418 = vadd.s32 %v1417, %v1408
        %v1419 = vmul.u32 %v1374, %v1365
        %v1420 = vadd.s32 %v1396, %v1415
        %vm1421 = vc.u32 %v1396, %v1415
        %v1422 = vadd.s32 %v1418, 1
        %v1423 = vsel %vm1421, %v1422, %v1418
        %v1424 = vadd.s32 %v1419, %v1423
        %v1425 = vadd.s32 %v1424, 536870912
        %v1426 = vshrl.u32 %v1425, 30
        %v1427 = vshll.u32 %v1426, 30
        %v1428 = vsub.s32 %v1424, %v1427
        %vm1429 = vcmp.lt.s32.totalorder %v1428, 0
        %v1430 = vsub.s32 0, %v1428
        %v1431 = vsel %vm1429, %v1430, %v1428
        %v1432 = vclz %v1431
        %v1433 = vsub.s32 %v1432, 2
        %vm1434 = vcmp.gt.s32.totalorder 0, %v1433
        %v1435 = vsel %vm1434, 0, %v1433
        %v1436 = vsub.s32 32, %v1435
        %v1437 = vshll.u32 %v1428, %v1435
        %v1438 = vshrl.u32 %v1420, %v1436
        %v1439 = vor.u32 %v1437, %v1438
        %v1440 = vsub.s32 4294967266, %v1435
        %v1441 = vadd.s32 %v1440, 127
        %v1442 = vshll.u32 %v1441, 23
        %v1443 = vor.u32 4788187, %v1442
        %v1444 = vand.u32 2147483647, %v1443
        %v1446 = vcvt.s32.f32 %v1439
        %v1447 = vmul.f32 %v1446, %v1444
        %v1448 = vxor.u32 %v1447, 2147483648
        %v1449 = vsel %vm1328, %v1448, %v1447
        %v1450 = vsub.s32 4, %v1426
        %v1451 = vsel %vm1328, %v1450, %v1426
        %v1452 = vsel %vm1327, %v1325, %v1449
        %v1453 = vsel %vm1327, 0, %v1451
        %v1454 = vmul.f32 %v1452, %v1452
        %v1455 = vmul.f32 %v1454, -0.001358992
        %v1456 = vadd.f32 %v1455, 0.041655596
        %v1457 = vmul.f32 %v1454, %v1456
        %v1458 = vadd.f32 %v1457, -0.4999988
        %v1459 = vmul.f32 %v1454, %v1458
        %v1460 = vadd.f32 1.0, %v1459
        %v1461 = vmul.f32 %v1452, %v1452
        %v1462 = vmul.f32 %v1461, -0.00019511016
        %v1463 = vadd.f32 %v1462, 0.008332121
        %v1464 = vmul.f32 %v1461, %v1463
        %v1465 = vadd.f32 %v1464, -0.16666654
        %v1466 = vmul.f32 %v1461, %v1465
        %v1467 = vadd.f32 %v1466, 1.0
        %v1468 = vmul.f32 %v1467, %v1452
        %vm1469 = vweird.f32 %v1325
        %v1470 = vadd.s32 %v1453, 3
        %v1471 = vand.u32 %v1470, 3
        %vm1472 = vcmp.lt.s32.totalorder %v1471, 2
        %vm1473 = vcmp.eq.s32.totalorder %v1471, 0
        %v1474 = vxor.u32 %v1468, 2147483648
        %v1475 = vsel %vm1473, %v1460, %v1474
        %vm1476 = vcmp.eq.s32.totalorder %v1471, 2
        %v1477 = vxor.u32 %v1460, 2147483648
        %v1478 = vsel %vm1476, %v1477, %v1468
        %v1479 = vsel %vm1472, %v1475, %v1478
        %v1480 = vsel %vm1469, nan, %v1479
        %v1481 = vld [vmem:[%s5 + $0x3] sm:$0x1]
        %v1482 = vperm.slane %v1481, 0
        %v1483 = vmul.f32 %v1480, %v1482
        %v1484 = vadd.f32 %v1322, %v1483
        %v1485 = vand.u32 2147483647, %v1325
        %vm1486 = vcmp.le.f32.partialorder %v1485, 0.7853982
        %vm1487 = vcmp.lt.s32.totalorder %v1325, 0
        %v1488 = vand.u32 %v1325, 2139095040
        %v1489 = vshrl.u32 %v1488, 23
        %v1490 = vsub.s32 %v1489, 127
        %v1491 = vand.u32 2147483647, %v1325
        %v1492 = vand.u32 %v1491, 8388607
        %v1493 = vor.u32 %v1492, 8388608
        %v1494 = vsub.s32 0, %v1493
        %v1495 = vadd.s32 %v1490, 1
        %vm1496 = vcmp.gt.s32.totalorder %v1495, 0
        %v1497 = vsel %vm1496, %v1495, 0
        %v1498 = vshrl.u32 %v1497, 5
        %v1499 = vand.u32 %v1497, 31
        %v1500 = vsub.s32 32, %v1499
        %v1501 = vshrl.u32 683565275, %v1500
        %v1502 = vshll.u32 683565275, %v1499
        %v1503 = vshrl.u32 2475754826, %v1500
        %v1504 = vor.u32 %v1502, %v1503
        %v1505 = vshll.u32 2475754826, %v1499
        %v1506 = vshrl.u32 2131351028, %v1500
        %v1507 = vor.u32 %v1505, %v1506
        %v1508 = vshll.u32 2131351028, %v1499
        %v1509 = vshrl.u32 2102212464, %v1500
        %v1510 = vor.u32 %v1508, %v1509
        %v1511 = vshll.u32 2102212464, %v1499
        %v1512 = vshrl.u32 920167782, %v1500
        %v1513 = vor.u32 %v1511, %v1512
        %v1514 = vshll.u32 920167782, %v1499
        %v1515 = vshrl.u32 1326507024, %v1500
        %v1516 = vor.u32 %v1514, %v1515
        %vm1517 = vcmp.lt.s32.totalorder %v1498, 1
        %vm1518 = vcmp.lt.s32.totalorder %v1498, 2
        %vm1519 = vcmp.lt.s32.totalorder %v1498, 3
        %vm1520 = vcmp.lt.s32.totalorder %v1498, 4
        %v1521 = vsel %vm1517, %v1501, %v1504
        %v1522 = vsel %vm1520, %v1510, 2102212464
        %v1523 = vsel %vm1519, %v1507, %v1522
        %v1524 = vsel %vm1518, %v1521, %v1523
        %v1525 = vsel %vm1517, %v1504, %v1507
        %v1526 = vsel %vm1520, %v1513, 920167782
        %v1527 = vsel %vm1519, %v1510, %v1526
        %v1528 = vsel %vm1518, %v1525, %v1527
        %v1529 = vsel %vm1517, %v1507, %v1510
        %v1530 = vsel %vm1520, %v1516, 1326507024
        %v1531 = vsel %vm1519, %v1513, %v1530
        %v1532 = vsel %vm1518, %v1529, %v1531
        %v1533 = vshll.u32 %v1493, 8
        %v1534 = vand.u32 %v1533, 65535
        %v1535 = vshrl.u32 %v1533, 16
        %v1536 = vand.u32 %v1532, 65535
        %v1537 = vshrl.u32 %v1532, 16
        %v1538 = vmul.u32 %v1534, %v1536
        %v1539 = vmul.u32 %v1534, %v1537
        %v1540 = vmul.u32 %v1535, %v1536
        %v1541 = vmul.u32 %v1535, %v1537
        %v1542 = vshll.u32 %v1539, 16
        %v1543 = vshrl.u32 %v1539, 16
        %v1544 = vshll.u32 %v1540, 16
        %v1545 = vshrl.u32 %v1540, 16
        %vm1546 = vc.u32 %v1538, %v1542
        %v1547 = vsel %vm1546, 1, 0
        %v1548 = vadd.s32 %v1538, %v1542
        %v1549 = vadd.s32 %v1541, %v1547
        %vm1550 = vc.u32 %v1548, %v1544
        %v1551 = vsel %vm1550, 1, 0
        %v1552 = vadd.s32 %v1548, %v1544
        %v1553 = vadd.s32 %v1549, %v1551
        %v1554 = vadd.s32 %v1553, %v1543
        %v1555 = vadd.s32 %v1554, %v1545
        %v1556 = vand.u32 %v1533, 65535
        %v1557 = vshrl.u32 %v1533, 16
        %v1558 = vand.u32 %v1528, 65535
        %v1559 = vshrl.u32 %v1528, 16
        %v1560 = vmul.u32 %v1556, %v1558
        %v1561 = vmul.u32 %v1556, %v1559
        %v1562 = vmul.u32 %v1557, %v1558
        %v1563 = vmul.u32 %v1557, %v1559
        %v1564 = vshll.u32 %v1561, 16
        %v1565 = vshrl.u32 %v1561, 16
        %v1566 = vshll.u32 %v1562, 16
        %v1567 = vshrl.u32 %v1562, 16
        %vm1568 = vc.u32 %v1560, %v1564
        %v1569 = vsel %vm1568, 1, 0
        %v1570 = vadd.s32 %v1560, %v1564
        %v1571 = vadd.s32 %v1563, %v1569
        %vm1572 = vc.u32 %v1570, %v1566
        %v1573 = vsel %vm1572, 1, 0
        %v1574 = vadd.s32 %v1570, %v1566
        %v1575 = vadd.s32 %v1571, %v1573
        %v1576 = vadd.s32 %v1575, %v1565
        %v1577 = vadd.s32 %v1576, %v1567
        %v1578 = vmul.u32 %v1533, %v1524
        %v1579 = vadd.s32 %v1555, %v1574
        %vm1580 = vc.u32 %v1555, %v1574
        %v1581 = vadd.s32 %v1577, 1
        %v1582 = vsel %vm1580, %v1581, %v1577
        %v1583 = vadd.s32 %v1578, %v1582
        %v1584 = vadd.s32 %v1583, 536870912
        %v1585 = vshrl.u32 %v1584, 30
        %v1586 = vshll.u32 %v1585, 30
        %v1587 = vsub.s32 %v1583, %v1586
        %vm1588 = vcmp.lt.s32.totalorder %v1587, 0
        %v1589 = vsub.s32 0, %v1587
        %v1590 = vsel %vm1588, %v1589, %v1587
        %v1591 = vclz %v1590
        %v1592 = vsub.s32 %v1591, 2
        %vm1593 = vcmp.gt.s32.totalorder 0, %v1592
        %v1594 = vsel %vm1593, 0, %v1592
        %v1595 = vsub.s32 32, %v1594
        %v1596 = vshll.u32 %v1587, %v1594
        %v1597 = vshrl.u32 %v1579, %v1595
        %v1598 = vor.u32 %v1596, %v1597
        %v1599 = vsub.s32 4294967266, %v1594
        %v1600 = vadd.s32 %v1599, 127
        %v1601 = vshll.u32 %v1600, 23
        %v1602 = vor.u32 4788187, %v1601
        %v1603 = vand.u32 2147483647, %v1602
        %v1605 = vcvt.s32.f32 %v1598
        %v1606 = vmul.f32 %v1605, %v1603
        %v1607 = vxor.u32 %v1606, 2147483648
        %v1608 = vsel %vm1487, %v1607, %v1606
        %v1609 = vsub.s32 4, %v1585
        %v1610 = vsel %vm1487, %v1609, %v1585
        %v1611 = vsel %vm1486, %v1325, %v1608
        %v1612 = vsel %vm1486, 0, %v1610
        %v1613 = vmul.f32 %v1611, %v1611
        %v1614 = vmul.f32 %v1613, -0.001358992
        %v1615 = vadd.f32 %v1614, 0.041655596
        %v1616 = vmul.f32 %v1613, %v1615
        %v1617 = vadd.f32 %v1616, -0.4999988
        %v1618 = vmul.f32 %v1613, %v1617
        %v1619 = vadd.f32 1.0, %v1618
        %v1620 = vmul.f32 %v1611, %v1611
        %v1621 = vmul.f32 %v1620, -0.00019511016
        %v1622 = vadd.f32 %v1621, 0.008332121
        %v1623 = vmul.f32 %v1620, %v1622
        %v1624 = vadd.f32 %v1623, -0.16666654
        %v1625 = vmul.f32 %v1620, %v1624
        %v1626 = vadd.f32 %v1625, 1.0
        %v1627 = vmul.f32 %v1626, %v1611
        %vm1628 = vweird.f32 %v1325
        %v1629 = vand.u32 %v1612, 3
        %vm1630 = vcmp.lt.s32.totalorder %v1629, 2
        %vm1631 = vcmp.eq.s32.totalorder %v1629, 0
        %v1632 = vxor.u32 %v1627, 2147483648
        %v1633 = vsel %vm1631, %v1619, %v1632
        %vm1634 = vcmp.eq.s32.totalorder %v1629, 2
        %v1635 = vxor.u32 %v1619, 2147483648
        %v1636 = vsel %vm1634, %v1635, %v1627
        %v1637 = vsel %vm1630, %v1633, %v1636
        %v1638 = vsel %vm1628, nan, %v1637
        %v1639 = vld [vmem:[%s6 + $0x3] sm:$0x1]
        %v1640 = vperm.slane %v1639, 0
        %v1641 = vmul.f32 %v1638, %v1640
        %v1642 = vadd.f32 %v1484, %v1641
        %s1643 = scalar_lea.vmem [#allocation2], %s351
        %v1644 = vld [vmem:[%s1643] sm:$0xff]
        %v1645 = vadd.f32 %v1642, %v1644
        %1646 = vst [vmem:[%s260] sm:$0xff] %v1645
        %s1647 = sand.u32 %s168, 1
        %s1648 = scalar_lea.sflag [#allocation7], %s1647
        %s1649 = sand.u32 %s168, 1
        %s1650 = smul.addr %s1649, 8
        %s1651 = scalar_lea.vmem [#allocation6], %s1650
        // Predicated region
        $region71: #{tpu_custom_call.1} parent=39 // pred_check
          %p1652 = pneg %p178
        $region72: #{tpu_custom_call.1} parent=39 // pred_check_branch
          %1654 = sbr.rel (%p1652) target = $region74
        $region73: #{tpu_custom_call.1} parent=39 // pred_region
          %1656 = vsyncadd %s1648, 0
          %s1657 = sadd.s32 %s33, %s34
          %s1658 = smul.addr %s1657, 8
          %s1659 = scalar_lea.hbm %s7, %s1658
          %s1661 = sshll.u32 %s1651, 4
          %s1662 = int_to_ptr.vmem [resolvable:$true] %s1661
          %s1663 = sshll.u32 %s1659, 4
          %s1664 = int_to_ptr.hbm [resolvable:$true] %s1663
          %1666 = dma.vmem_to_hbm [thread:$0]  %s1662, 128, %s1664, %s1648
        $region74: #{tpu_custom_call.1} parent=39 // pred_fallthru
          _
      $region40: #{tpu_custom_call.1} parent=5 // pred_fallthru
        _
      %p1667 = scmp.le.s32.totalorder 2, %s24
      // Predicated region
      $region75: #{tpu_custom_call.1} parent=5 // pred_check
        %p1668 = pneg %p1667
      $region76: #{tpu_custom_call.1} parent=5 // pred_check_branch
        %1670 = sbr.rel (%p1668) target = $region78
      $region77: #{tpu_custom_call.1} parent=5 // pred_region
        %s1671 = ssub.s32 %s24, 2
        // Predicated region
        $region79: #{tpu_custom_call.1} parent=77 // pred_check
          %p1672 = pneg %p184
        $region80: #{tpu_custom_call.1} parent=77 // pred_check_branch
          %1674 = sbr.rel (%p1672) target = $region82
        $region81: #{tpu_custom_call.1} parent=77 // pred_region
          %s1675 = sand.u32 %s169, 1
          %s1676 = scalar_lea.sflag [#allocation7], %s1675
          %s1677 = sand.u32 %s169, 1
          %s1678 = smul.addr %s1677, 8
          %s1679 = scalar_lea.vmem [#allocation6], %s1678
          %1681 = dma.done %s1676, 128
        $region82: #{tpu_custom_call.1} parent=77 // pred_fallthru
          _
      $region78: #{tpu_custom_call.1} parent=5 // pred_fallthru
        _
    $region6: #{tpu_custom_call.1} parent=1 // loop_footer
      %s28 = sadd.s32 1, %s24
    $region7: #{tpu_custom_call.1} parent=1 // loop_footer_branch
      %23 = sbr.rel target = $region3
    $region8: #{tpu_custom_call.1} parent=1 // loop_exit
      _
    %1682 = vsyncpa [#allocation7], 1
    %s1683 = scalar_lea.sflag [#allocation7], 1
    %1684 = vsyncpa %s1683, 1
  %1685 = vsyncmov [#allocation3]
  %s1686 = vpop.sfrf %1685
  %p1687 = scmp.eq.s32.totalorder %s1686, 0
  %p1688 = pneg %p1687
  %1690 = shalt.err (%p1688)
  %s1691 = scalar_lea.sflag [#allocation3], 1
  %1692 = vsyncmov %s1691
  %s1693 = vpop.sfrf %1692
  %p1694 = scmp.eq.s32.totalorder %s1693, 0
  %p1695 = pneg %p1694
  %1697 = shalt.err (%p1695)

</llo_original>
